<compile_context>
chip_gen: v7x
topology: tpu7x:2x2x1
jax: 0.10.0
libtpu: 0.0.40
codegen_flags: <defaults>
</compile_context>

<pallas_src>
import functools

import jax
import jax.numpy as jnp
from jax.experimental import pallas as pl
from jax.experimental.pallas import tpu as pltpu

EPS = 1e-5
CP = 8      # channels padded to one f32 sublane tile
HALO = 128  # lane halo around flattened spatial axis (>= W+1, lane-aligned)


def _resblock_kernel(x_ref, yy_ref, xx_ref,
                     w1_ref, g1_ref, be1_ref,
                     w2_ref, g2_ref, be2_ref,
                     o_ref, halo_ref, *, h, w):
    """Fused ResidualBlock forward in (CP, M) lane-dense layout.

    x_ref  : (CP, M)  input, channels on sublanes (rows >= Cin are zero)
    yy_ref : (CP, M)  int32 y-coordinate of each flattened position
    xx_ref : (CP, M)  int32 x-coordinate of each flattened position
    w*_ref : (CP, 9*CP) flattened conv weights  w[co, t*CP + ci]
    g*/be* : (CP, 1)  BN gamma / beta (zero-padded rows)
    o_ref  : (CP, M)  output
    halo_ref: (CP, M + 2*HALO) VMEM scratch with zero halos for tap shifts
    """
    m = x_ref.shape[1]
    yy = yy_ref[...]
    xx = xx_ref[...]

    # Zero the halo scratch once; only the centre is rewritten per conv.
    halo_ref[...] = jnp.zeros_like(halo_ref)

    def conv3x3_bn(hin, w_ref, g_ref, be_ref):
        """BN(conv3x3(hin)).  Conv bias omitted: it cancels exactly against
        the BatchNorm mean subtraction."""
        halo_ref[:, HALO:HALO + m] = hin               # lane-aligned store
        slabs = []
        for t in range(9):                             # tap = (dy, dx)
            ody, odx = t // 3 - 1, t % 3 - 1
            s = ody * w + odx                          # flat-index shift
            shifted = halo_ref[:, HALO + s:HALO + s + m]   # static slice
            valid = ((yy + ody >= 0) & (yy + ody < h) &
                     (xx + odx >= 0) & (xx + odx < w))
            slabs.append(jnp.where(valid, shifted, 0.0))
        patches = jnp.concatenate(slabs, axis=0)       # (9*CP, M), sublane-aligned
        acc = jnp.dot(w_ref[...], patches,             # ONE K = 9*CP matmul (MXU)
                      preferred_element_type=jnp.float32)  # (CP, M), lane-dense
        # BatchNorm2d, training-mode batch statistics over all M positions.
        mean = jnp.mean(acc, axis=1, keepdims=True)
        centered = acc - mean
        var = jnp.mean(centered * centered, axis=1, keepdims=True)
        return centered * jax.lax.rsqrt(var + EPS) * g_ref[...] + be_ref[...]

    x = x_ref[...]
    h1 = jnp.maximum(conv3x3_bn(x, w1_ref, g1_ref, be1_ref), 0.0)
    out = conv3x3_bn(h1, w2_ref, g2_ref, be2_ref) + x          # residual add
    o_ref[...] = jnp.maximum(out, 0.0)


def residual_block_forward(x_nchw, params):
    """Forward pass of ResidualBlock (stride=1, downsample=None). NCHW in/out."""
    # TODO(synk): general `stride` / `downsample` module not implemented (the
    # provided instantiation uses stride=1, downsample=None, Cin == Cout).
    w1, b1, g1, be1, w2, b2, g2, be2 = params
    del b1, b2  # conv biases cancel exactly under the following BatchNorm
    n, c, hh, ww = x_nchw.shape
    cout = w1.shape[0]
    assert c == cout and c <= CP, "downsample=None requires Cin == Cout <= 8"
    m = n * hh * ww
    # TODO(synk): for M that is not a multiple of 128 or too large for VMEM,
    # add lane padding/masking and an M-tiled grid with a two-pass BatchNorm.
    assert m % 128 == 0 and HALO >= ww + 1

    f32 = jnp.float32
    # (N,C,H,W) -> lane-dense channel-major (CP, M); channel rows c..CP-1 zero.
    x_cm = jnp.transpose(x_nchw, (1, 0, 2, 3)).reshape(c, m).astype(f32)
    x_pad = jnp.zeros((CP, m), f32).at[:c].set(x_cm)

    # Per-position (y, x) coordinates for the conv boundary masks.
    mm = jnp.arange(m, dtype=jnp.int32)
    yy = jnp.broadcast_to(((mm // ww) % hh)[None, :], (CP, m))
    xx = jnp.broadcast_to((mm % ww)[None, :], (CP, m))

    def flat_w(wt):  # (Cout, Cin, 3, 3) -> (CP, 9*CP): w[co, (ky*3+kx)*CP + ci]
        co, ci = wt.shape[0], wt.shape[1]
        w9 = jnp.transpose(wt, (0, 2, 3, 1)).reshape(co, 9, ci).astype(f32)
        return jnp.zeros((CP, 9, CP), f32).at[:co, :, :ci].set(w9).reshape(CP, 9 * CP)

    def pad_vec(v):  # (C,) -> (CP, 1), zero-padded
        return jnp.zeros((CP, 1), f32).at[:v.shape[0], 0].set(v.astype(f32))

    kernel = functools.partial(_resblock_kernel, h=hh, w=ww)
    vmem = pl.BlockSpec(memory_space=pltpu.MemorySpace.VMEM)
    out = pl.pallas_call(
        kernel,
        out_shape=jax.ShapeDtypeStruct((CP, m), f32),
        in_specs=[vmem] * 9,
        out_specs=vmem,
        scratch_shapes=[pltpu.VMEM((CP, m + 2 * HALO), f32)],
    )(x_pad, yy, xx,
      flat_w(w1), pad_vec(g1), pad_vec(be1),
      flat_w(w2), pad_vec(g2), pad_vec(be2))

    return jnp.transpose(out[:c].reshape(c, n, hh, ww), (1, 0, 2, 3))


def _reference_forward(x, params):
    """Pure-JAX (XLA conv) reference matching the PyTorch forward."""
    w1, b1, g1, be1, w2, b2, g2, be2 = params

    def conv(h, wt, b):
        y = jax.lax.conv_general_dilated(
            h, wt, window_strides=(1, 1), padding=((1, 1), (1, 1)),
            dimension_numbers=("NCHW", "OIHW", "NCHW"))
        return y + b[None, :, None, None]

    def bn(h, g, be):
        mean = jnp.mean(h, axis=(0, 2, 3), keepdims=True)
        var = jnp.mean(jnp.square(h - mean), axis=(0, 2, 3), keepdims=True)
        return (h - mean) * jax.lax.rsqrt(var + EPS) * g[None, :, None, None] \
            + be[None, :, None, None]

    out = jnp.maximum(bn(conv(x, w1, b1), g1, be1), 0.0)
    out = bn(conv(out, w2, b2), g2, be2) + x
    return jnp.maximum(out, 0.0)


if __name__ == "__main__":
    N, C, H, W = 2, 4, 16, 16  # in_channel = out_channel = 4, stride = 1

    key = jax.random.PRNGKey(0)
    ks = jax.random.split(key, 9)
    x = jax.random.normal(ks[0], (N, C, H, W), jnp.float32)

    # Deterministic parameter init (shapes per nn.Conv2d / nn.BatchNorm2d).
    w1 = 0.1 * jax.random.normal(ks[1], (C, C, 3, 3), jnp.float32)
    b1 = 0.1 * jax.random.normal(ks[2], (C,), jnp.float32)
    w2 = 0.1 * jax.random.normal(ks[3], (C, C, 3, 3), jnp.float32)
    b2 = 0.1 * jax.random.normal(ks[4], (C,), jnp.float32)
    g1 = 1.0 + 0.1 * jax.random.normal(ks[5], (C,), jnp.float32)
    be1 = 0.1 * jax.random.normal(ks[6], (C,), jnp.float32)
    g2 = 1.0 + 0.1 * jax.random.normal(ks[7], (C,), jnp.float32)
    be2 = 0.1 * jax.random.normal(ks[8], (C,), jnp.float32)
    params = (w1, b1, g1, be1, w2, b2, g2, be2)

    out = jax.block_until_ready(residual_block_forward(x, params))
    ref = jax.block_until_ready(_reference_forward(x, params))

    assert out.shape == (N, C, H, W) and out.dtype == jnp.float32
    assert jnp.allclose(out, ref, atol=2e-2, rtol=2e-2), "mismatch vs reference"
    print("KERNEL_OK")
</pallas_src>

<mosaic_0001>
module attributes {stable_mosaic.version = 11 : i64} {
  func.func @_resblock_kernel(%arg0: memref<8x512xf32, #tpu.memory_space<vmem>>, %arg1: memref<8x512xi32, #tpu.memory_space<vmem>>, %arg2: memref<8x512xi32, #tpu.memory_space<vmem>>, %arg3: memref<8x72xf32, #tpu.memory_space<vmem>>, %arg4: memref<8x1xf32, #tpu.memory_space<vmem>>, %arg5: memref<8x1xf32, #tpu.memory_space<vmem>>, %arg6: memref<8x72xf32, #tpu.memory_space<vmem>>, %arg7: memref<8x1xf32, #tpu.memory_space<vmem>>, %arg8: memref<8x1xf32, #tpu.memory_space<vmem>>, %arg9: memref<8x512xf32, #tpu.memory_space<vmem>>, %arg10: memref<8x768xf32, #tpu.memory_space<vmem>>) attributes {dimension_semantics = [], scalar_prefetch = 0 : i64, scratch_operands = 1 : i64, tpu.core_type = #tpu.core_type<tc>} {
    %c0 = arith.constant 0 : index
    %c0_0 = arith.constant 0 : index
    %0 = vector.load %arg1[%c0, %c0_0] : memref<8x512xi32, #tpu.memory_space<vmem>>, vector<8x512xi32>
    %c0_1 = arith.constant 0 : index
    %c0_2 = arith.constant 0 : index
    %1 = vector.load %arg2[%c0_1, %c0_2] : memref<8x512xi32, #tpu.memory_space<vmem>>, vector<8x512xi32>
    %cst = arith.constant 0.000000e+00 : f32
    %2 = vector.broadcast %cst : f32 to vector<8x768xf32>
    %c0_3 = arith.constant 0 : index
    %c0_4 = arith.constant 0 : index
    %3 = vector.load %arg10[%c0_3, %c0_4] : memref<8x768xf32, #tpu.memory_space<vmem>>, vector<8x768xf32>
    tpu.vector_store %arg10[%c0_3, %c0_4], %2 {strides = array<i32>} : memref<8x768xf32, #tpu.memory_space<vmem>>, vector<8x768xf32>,
    %c0_5 = arith.constant 0 : index
    %c0_6 = arith.constant 0 : index
    %4 = vector.load %arg0[%c0_5, %c0_6] : memref<8x512xf32, #tpu.memory_space<vmem>>, vector<8x512xf32>
    %c0_7 = arith.constant 0 : index
    %c128 = arith.constant 128 : index
    %5 = vector.load %arg10[%c0_7, %c128] : memref<8x768xf32, #tpu.memory_space<vmem>>, vector<8x512xf32>
    tpu.vector_store %arg10[%c0_7, %c128], %4 {strides = array<i32>} : memref<8x768xf32, #tpu.memory_space<vmem>>, vector<8x512xf32>,
    %c0_8 = arith.constant 0 : index
    %c111 = arith.constant 111 : index
    %6 = vector.load %arg10[%c0_8, %c111] : memref<8x768xf32, #tpu.memory_space<vmem>>, vector<8x512xf32>
    %c-1_i32 = arith.constant -1 : i32
    %7 = vector.broadcast %c-1_i32 : i32 to vector<8x512xi32>
    %8 = arith.addi %0, %7 : vector<8x512xi32>
    %c0_i32 = arith.constant 0 : i32
    %9 = vector.broadcast %c0_i32 : i32 to vector<8x512xi32>
    %10 = arith.cmpi sge, %8, %9 : vector<8x512xi32>
    %c-1_i32_9 = arith.constant -1 : i32
    %11 = vector.broadcast %c-1_i32_9 : i32 to vector<8x512xi32>
    %12 = arith.addi %0, %11 : vector<8x512xi32>
    %c16_i32 = arith.constant 16 : i32
    %13 = vector.broadcast %c16_i32 : i32 to vector<8x512xi32>
    %14 = arith.cmpi slt, %12, %13 : vector<8x512xi32>
    %15 = arith.andi %10, %14 : vector<8x512xi1>
    %c-1_i32_10 = arith.constant -1 : i32
    %16 = vector.broadcast %c-1_i32_10 : i32 to vector<8x512xi32>
    %17 = arith.addi %1, %16 : vector<8x512xi32>
    %c0_i32_11 = arith.constant 0 : i32
    %18 = vector.broadcast %c0_i32_11 : i32 to vector<8x512xi32>
    %19 = arith.cmpi sge, %17, %18 : vector<8x512xi32>
    %20 = arith.andi %15, %19 : vector<8x512xi1>
    %c-1_i32_12 = arith.constant -1 : i32
    %21 = vector.broadcast %c-1_i32_12 : i32 to vector<8x512xi32>
    %22 = arith.addi %1, %21 : vector<8x512xi32>
    %c16_i32_13 = arith.constant 16 : i32
    %23 = vector.broadcast %c16_i32_13 : i32 to vector<8x512xi32>
    %24 = arith.cmpi slt, %22, %23 : vector<8x512xi32>
    %25 = arith.andi %20, %24 : vector<8x512xi1>
    %cst_14 = arith.constant 0.000000e+00 : f32
    %26 = vector.broadcast %cst_14 : f32 to vector<8x512xf32>
    %27 = arith.select %25, %6, %26 : vector<8x512xi1>, vector<8x512xf32>
    %c0_15 = arith.constant 0 : index
    %c112 = arith.constant 112 : index
    %28 = vector.load %arg10[%c0_15, %c112] : memref<8x768xf32, #tpu.memory_space<vmem>>, vector<8x512xf32>
    %c-1_i32_16 = arith.constant -1 : i32
    %29 = vector.broadcast %c-1_i32_16 : i32 to vector<8x512xi32>
    %30 = arith.addi %0, %29 : vector<8x512xi32>
    %c0_i32_17 = arith.constant 0 : i32
    %31 = vector.broadcast %c0_i32_17 : i32 to vector<8x512xi32>
    %32 = arith.cmpi sge, %30, %31 : vector<8x512xi32>
    %c-1_i32_18 = arith.constant -1 : i32
    %33 = vector.broadcast %c-1_i32_18 : i32 to vector<8x512xi32>
    %34 = arith.addi %0, %33 : vector<8x512xi32>
    %c16_i32_19 = arith.constant 16 : i32
    %35 = vector.broadcast %c16_i32_19 : i32 to vector<8x512xi32>
    %36 = arith.cmpi slt, %34, %35 : vector<8x512xi32>
    %37 = arith.andi %32, %36 : vector<8x512xi1>
    %c0_i32_20 = arith.constant 0 : i32
    %38 = vector.broadcast %c0_i32_20 : i32 to vector<8x512xi32>
    %39 = arith.addi %1, %38 : vector<8x512xi32>
    %c0_i32_21 = arith.constant 0 : i32
    %40 = vector.broadcast %c0_i32_21 : i32 to vector<8x512xi32>
    %41 = arith.cmpi sge, %39, %40 : vector<8x512xi32>
    %42 = arith.andi %37, %41 : vector<8x512xi1>
    %c0_i32_22 = arith.constant 0 : i32
    %43 = vector.broadcast %c0_i32_22 : i32 to vector<8x512xi32>
    %44 = arith.addi %1, %43 : vector<8x512xi32>
    %c16_i32_23 = arith.constant 16 : i32
    %45 = vector.broadcast %c16_i32_23 : i32 to vector<8x512xi32>
    %46 = arith.cmpi slt, %44, %45 : vector<8x512xi32>
    %47 = arith.andi %42, %46 : vector<8x512xi1>
    %cst_24 = arith.constant 0.000000e+00 : f32
    %48 = vector.broadcast %cst_24 : f32 to vector<8x512xf32>
    %49 = arith.select %47, %28, %48 : vector<8x512xi1>, vector<8x512xf32>
    %c0_25 = arith.constant 0 : index
    %c113 = arith.constant 113 : index
    %50 = vector.load %arg10[%c0_25, %c113] : memref<8x768xf32, #tpu.memory_space<vmem>>, vector<8x512xf32>
    %c-1_i32_26 = arith.constant -1 : i32
    %51 = vector.broadcast %c-1_i32_26 : i32 to vector<8x512xi32>
    %52 = arith.addi %0, %51 : vector<8x512xi32>
    %c0_i32_27 = arith.constant 0 : i32
    %53 = vector.broadcast %c0_i32_27 : i32 to vector<8x512xi32>
    %54 = arith.cmpi sge, %52, %53 : vector<8x512xi32>
    %c-1_i32_28 = arith.constant -1 : i32
    %55 = vector.broadcast %c-1_i32_28 : i32 to vector<8x512xi32>
    %56 = arith.addi %0, %55 : vector<8x512xi32>
    %c16_i32_29 = arith.constant 16 : i32
    %57 = vector.broadcast %c16_i32_29 : i32 to vector<8x512xi32>
    %58 = arith.cmpi slt, %56, %57 : vector<8x512xi32>
    %59 = arith.andi %54, %58 : vector<8x512xi1>
    %c1_i32 = arith.constant 1 : i32
    %60 = vector.broadcast %c1_i32 : i32 to vector<8x512xi32>
    %61 = arith.addi %1, %60 : vector<8x512xi32>
    %c0_i32_30 = arith.constant 0 : i32
    %62 = vector.broadcast %c0_i32_30 : i32 to vector<8x512xi32>
    %63 = arith.cmpi sge, %61, %62 : vector<8x512xi32>
    %64 = arith.andi %59, %63 : vector<8x512xi1>
    %c1_i32_31 = arith.constant 1 : i32
    %65 = vector.broadcast %c1_i32_31 : i32 to vector<8x512xi32>
    %66 = arith.addi %1, %65 : vector<8x512xi32>
    %c16_i32_32 = arith.constant 16 : i32
    %67 = vector.broadcast %c16_i32_32 : i32 to vector<8x512xi32>
    %68 = arith.cmpi slt, %66, %67 : vector<8x512xi32>
    %69 = arith.andi %64, %68 : vector<8x512xi1>
    %cst_33 = arith.constant 0.000000e+00 : f32
    %70 = vector.broadcast %cst_33 : f32 to vector<8x512xf32>
    %71 = arith.select %69, %50, %70 : vector<8x512xi1>, vector<8x512xf32>
    %c0_34 = arith.constant 0 : index
    %c127 = arith.constant 127 : index
    %72 = vector.load %arg10[%c0_34, %c127] : memref<8x768xf32, #tpu.memory_space<vmem>>, vector<8x512xf32>
    %c0_i32_35 = arith.constant 0 : i32
    %73 = vector.broadcast %c0_i32_35 : i32 to vector<8x512xi32>
    %74 = arith.addi %0, %73 : vector<8x512xi32>
    %c0_i32_36 = arith.constant 0 : i32
    %75 = vector.broadcast %c0_i32_36 : i32 to vector<8x512xi32>
    %76 = arith.cmpi sge, %74, %75 : vector<8x512xi32>
    %c0_i32_37 = arith.constant 0 : i32
    %77 = vector.broadcast %c0_i32_37 : i32 to vector<8x512xi32>
    %78 = arith.addi %0, %77 : vector<8x512xi32>
    %c16_i32_38 = arith.constant 16 : i32
    %79 = vector.broadcast %c16_i32_38 : i32 to vector<8x512xi32>
    %80 = arith.cmpi slt, %78, %79 : vector<8x512xi32>
    %81 = arith.andi %76, %80 : vector<8x512xi1>
    %c-1_i32_39 = arith.constant -1 : i32
    %82 = vector.broadcast %c-1_i32_39 : i32 to vector<8x512xi32>
    %83 = arith.addi %1, %82 : vector<8x512xi32>
    %c0_i32_40 = arith.constant 0 : i32
    %84 = vector.broadcast %c0_i32_40 : i32 to vector<8x512xi32>
    %85 = arith.cmpi sge, %83, %84 : vector<8x512xi32>
    %86 = arith.andi %81, %85 : vector<8x512xi1>
    %c-1_i32_41 = arith.constant -1 : i32
    %87 = vector.broadcast %c-1_i32_41 : i32 to vector<8x512xi32>
    %88 = arith.addi %1, %87 : vector<8x512xi32>
    %c16_i32_42 = arith.constant 16 : i32
    %89 = vector.broadcast %c16_i32_42 : i32 to vector<8x512xi32>
    %90 = arith.cmpi slt, %88, %89 : vector<8x512xi32>
    %91 = arith.andi %86, %90 : vector<8x512xi1>
    %cst_43 = arith.constant 0.000000e+00 : f32
    %92 = vector.broadcast %cst_43 : f32 to vector<8x512xf32>
    %93 = arith.select %91, %72, %92 : vector<8x512xi1>, vector<8x512xf32>
    %c0_44 = arith.constant 0 : index
    %c128_45 = arith.constant 128 : index
    %94 = vector.load %arg10[%c0_44, %c128_45] : memref<8x768xf32, #tpu.memory_space<vmem>>, vector<8x512xf32>
    %c0_i32_46 = arith.constant 0 : i32
    %95 = vector.broadcast %c0_i32_46 : i32 to vector<8x512xi32>
    %96 = arith.addi %0, %95 : vector<8x512xi32>
    %c0_i32_47 = arith.constant 0 : i32
    %97 = vector.broadcast %c0_i32_47 : i32 to vector<8x512xi32>
    %98 = arith.cmpi sge, %96, %97 : vector<8x512xi32>
    %c0_i32_48 = arith.constant 0 : i32
    %99 = vector.broadcast %c0_i32_48 : i32 to vector<8x512xi32>
    %100 = arith.addi %0, %99 : vector<8x512xi32>
    %c16_i32_49 = arith.constant 16 : i32
    %101 = vector.broadcast %c16_i32_49 : i32 to vector<8x512xi32>
    %102 = arith.cmpi slt, %100, %101 : vector<8x512xi32>
    %103 = arith.andi %98, %102 : vector<8x512xi1>
    %c0_i32_50 = arith.constant 0 : i32
    %104 = vector.broadcast %c0_i32_50 : i32 to vector<8x512xi32>
    %105 = arith.addi %1, %104 : vector<8x512xi32>
    %c0_i32_51 = arith.constant 0 : i32
    %106 = vector.broadcast %c0_i32_51 : i32 to vector<8x512xi32>
    %107 = arith.cmpi sge, %105, %106 : vector<8x512xi32>
    %108 = arith.andi %103, %107 : vector<8x512xi1>
    %c0_i32_52 = arith.constant 0 : i32
    %109 = vector.broadcast %c0_i32_52 : i32 to vector<8x512xi32>
    %110 = arith.addi %1, %109 : vector<8x512xi32>
    %c16_i32_53 = arith.constant 16 : i32
    %111 = vector.broadcast %c16_i32_53 : i32 to vector<8x512xi32>
    %112 = arith.cmpi slt, %110, %111 : vector<8x512xi32>
    %113 = arith.andi %108, %112 : vector<8x512xi1>
    %cst_54 = arith.constant 0.000000e+00 : f32
    %114 = vector.broadcast %cst_54 : f32 to vector<8x512xf32>
    %115 = arith.select %113, %94, %114 : vector<8x512xi1>, vector<8x512xf32>
    %c0_55 = arith.constant 0 : index
    %c129 = arith.constant 129 : index
    %116 = vector.load %arg10[%c0_55, %c129] : memref<8x768xf32, #tpu.memory_space<vmem>>, vector<8x512xf32>
    %c0_i32_56 = arith.constant 0 : i32
    %117 = vector.broadcast %c0_i32_56 : i32 to vector<8x512xi32>
    %118 = arith.addi %0, %117 : vector<8x512xi32>
    %c0_i32_57 = arith.constant 0 : i32
    %119 = vector.broadcast %c0_i32_57 : i32 to vector<8x512xi32>
    %120 = arith.cmpi sge, %118, %119 : vector<8x512xi32>
    %c0_i32_58 = arith.constant 0 : i32
    %121 = vector.broadcast %c0_i32_58 : i32 to vector<8x512xi32>
    %122 = arith.addi %0, %121 : vector<8x512xi32>
    %c16_i32_59 = arith.constant 16 : i32
    %123 = vector.broadcast %c16_i32_59 : i32 to vector<8x512xi32>
    %124 = arith.cmpi slt, %122, %123 : vector<8x512xi32>
    %125 = arith.andi %120, %124 : vector<8x512xi1>
    %c1_i32_60 = arith.constant 1 : i32
    %126 = vector.broadcast %c1_i32_60 : i32 to vector<8x512xi32>
    %127 = arith.addi %1, %126 : vector<8x512xi32>
    %c0_i32_61 = arith.constant 0 : i32
    %128 = vector.broadcast %c0_i32_61 : i32 to vector<8x512xi32>
    %129 = arith.cmpi sge, %127, %128 : vector<8x512xi32>
    %130 = arith.andi %125, %129 : vector<8x512xi1>
    %c1_i32_62 = arith.constant 1 : i32
    %131 = vector.broadcast %c1_i32_62 : i32 to vector<8x512xi32>
    %132 = arith.addi %1, %131 : vector<8x512xi32>
    %c16_i32_63 = arith.constant 16 : i32
    %133 = vector.broadcast %c16_i32_63 : i32 to vector<8x512xi32>
    %134 = arith.cmpi slt, %132, %133 : vector<8x512xi32>
    %135 = arith.andi %130, %134 : vector<8x512xi1>
    %cst_64 = arith.constant 0.000000e+00 : f32
    %136 = vector.broadcast %cst_64 : f32 to vector<8x512xf32>
    %137 = arith.select %135, %116, %136 : vector<8x512xi1>, vector<8x512xf32>
    %c0_65 = arith.constant 0 : index
    %c143 = arith.constant 143 : index
    %138 = vector.load %arg10[%c0_65, %c143] : memref<8x768xf32, #tpu.memory_space<vmem>>, vector<8x512xf32>
    %c1_i32_66 = arith.constant 1 : i32
    %139 = vector.broadcast %c1_i32_66 : i32 to vector<8x512xi32>
    %140 = arith.addi %0, %139 : vector<8x512xi32>
    %c0_i32_67 = arith.constant 0 : i32
    %141 = vector.broadcast %c0_i32_67 : i32 to vector<8x512xi32>
    %142 = arith.cmpi sge, %140, %141 : vector<8x512xi32>
    %c1_i32_68 = arith.constant 1 : i32
    %143 = vector.broadcast %c1_i32_68 : i32 to vector<8x512xi32>
    %144 = arith.addi %0, %143 : vector<8x512xi32>
    %c16_i32_69 = arith.constant 16 : i32
    %145 = vector.broadcast %c16_i32_69 : i32 to vector<8x512xi32>
    %146 = arith.cmpi slt, %144, %145 : vector<8x512xi32>
    %147 = arith.andi %142, %146 : vector<8x512xi1>
    %c-1_i32_70 = arith.constant -1 : i32
    %148 = vector.broadcast %c-1_i32_70 : i32 to vector<8x512xi32>
    %149 = arith.addi %1, %148 : vector<8x512xi32>
    %c0_i32_71 = arith.constant 0 : i32
    %150 = vector.broadcast %c0_i32_71 : i32 to vector<8x512xi32>
    %151 = arith.cmpi sge, %149, %150 : vector<8x512xi32>
    %152 = arith.andi %147, %151 : vector<8x512xi1>
    %c-1_i32_72 = arith.constant -1 : i32
    %153 = vector.broadcast %c-1_i32_72 : i32 to vector<8x512xi32>
    %154 = arith.addi %1, %153 : vector<8x512xi32>
    %c16_i32_73 = arith.constant 16 : i32
    %155 = vector.broadcast %c16_i32_73 : i32 to vector<8x512xi32>
    %156 = arith.cmpi slt, %154, %155 : vector<8x512xi32>
    %157 = arith.andi %152, %156 : vector<8x512xi1>
    %cst_74 = arith.constant 0.000000e+00 : f32
    %158 = vector.broadcast %cst_74 : f32 to vector<8x512xf32>
    %159 = arith.select %157, %138, %158 : vector<8x512xi1>, vector<8x512xf32>
    %c0_75 = arith.constant 0 : index
    %c144 = arith.constant 144 : index
    %160 = vector.load %arg10[%c0_75, %c144] : memref<8x768xf32, #tpu.memory_space<vmem>>, vector<8x512xf32>
    %c1_i32_76 = arith.constant 1 : i32
    %161 = vector.broadcast %c1_i32_76 : i32 to vector<8x512xi32>
    %162 = arith.addi %0, %161 : vector<8x512xi32>
    %c0_i32_77 = arith.constant 0 : i32
    %163 = vector.broadcast %c0_i32_77 : i32 to vector<8x512xi32>
    %164 = arith.cmpi sge, %162, %163 : vector<8x512xi32>
    %c1_i32_78 = arith.constant 1 : i32
    %165 = vector.broadcast %c1_i32_78 : i32 to vector<8x512xi32>
    %166 = arith.addi %0, %165 : vector<8x512xi32>
    %c16_i32_79 = arith.constant 16 : i32
    %167 = vector.broadcast %c16_i32_79 : i32 to vector<8x512xi32>
    %168 = arith.cmpi slt, %166, %167 : vector<8x512xi32>
    %169 = arith.andi %164, %168 : vector<8x512xi1>
    %c0_i32_80 = arith.constant 0 : i32
    %170 = vector.broadcast %c0_i32_80 : i32 to vector<8x512xi32>
    %171 = arith.addi %1, %170 : vector<8x512xi32>
    %c0_i32_81 = arith.constant 0 : i32
    %172 = vector.broadcast %c0_i32_81 : i32 to vector<8x512xi32>
    %173 = arith.cmpi sge, %171, %172 : vector<8x512xi32>
    %174 = arith.andi %169, %173 : vector<8x512xi1>
    %c0_i32_82 = arith.constant 0 : i32
    %175 = vector.broadcast %c0_i32_82 : i32 to vector<8x512xi32>
    %176 = arith.addi %1, %175 : vector<8x512xi32>
    %c16_i32_83 = arith.constant 16 : i32
    %177 = vector.broadcast %c16_i32_83 : i32 to vector<8x512xi32>
    %178 = arith.cmpi slt, %176, %177 : vector<8x512xi32>
    %179 = arith.andi %174, %178 : vector<8x512xi1>
    %cst_84 = arith.constant 0.000000e+00 : f32
    %180 = vector.broadcast %cst_84 : f32 to vector<8x512xf32>
    %181 = arith.select %179, %160, %180 : vector<8x512xi1>, vector<8x512xf32>
    %c0_85 = arith.constant 0 : index
    %c145 = arith.constant 145 : index
    %182 = vector.load %arg10[%c0_85, %c145] : memref<8x768xf32, #tpu.memory_space<vmem>>, vector<8x512xf32>
    %c1_i32_86 = arith.constant 1 : i32
    %183 = vector.broadcast %c1_i32_86 : i32 to vector<8x512xi32>
    %184 = arith.addi %0, %183 : vector<8x512xi32>
    %c0_i32_87 = arith.constant 0 : i32
    %185 = vector.broadcast %c0_i32_87 : i32 to vector<8x512xi32>
    %186 = arith.cmpi sge, %184, %185 : vector<8x512xi32>
    %c1_i32_88 = arith.constant 1 : i32
    %187 = vector.broadcast %c1_i32_88 : i32 to vector<8x512xi32>
    %188 = arith.addi %0, %187 : vector<8x512xi32>
    %c16_i32_89 = arith.constant 16 : i32
    %189 = vector.broadcast %c16_i32_89 : i32 to vector<8x512xi32>
    %190 = arith.cmpi slt, %188, %189 : vector<8x512xi32>
    %191 = arith.andi %186, %190 : vector<8x512xi1>
    %c1_i32_90 = arith.constant 1 : i32
    %192 = vector.broadcast %c1_i32_90 : i32 to vector<8x512xi32>
    %193 = arith.addi %1, %192 : vector<8x512xi32>
    %c0_i32_91 = arith.constant 0 : i32
    %194 = vector.broadcast %c0_i32_91 : i32 to vector<8x512xi32>
    %195 = arith.cmpi sge, %193, %194 : vector<8x512xi32>
    %196 = arith.andi %191, %195 : vector<8x512xi1>
    %c1_i32_92 = arith.constant 1 : i32
    %197 = vector.broadcast %c1_i32_92 : i32 to vector<8x512xi32>
    %198 = arith.addi %1, %197 : vector<8x512xi32>
    %c16_i32_93 = arith.constant 16 : i32
    %199 = vector.broadcast %c16_i32_93 : i32 to vector<8x512xi32>
    %200 = arith.cmpi slt, %198, %199 : vector<8x512xi32>
    %201 = arith.andi %196, %200 : vector<8x512xi1>
    %cst_94 = arith.constant 0.000000e+00 : f32
    %202 = vector.broadcast %cst_94 : f32 to vector<8x512xf32>
    %203 = arith.select %201, %182, %202 : vector<8x512xi1>, vector<8x512xf32>
    %204 = tpu.concatenate %27, %49, %71, %93, %115, %137, %159, %181, %203 in 0 : vector<8x512xf32>, vector<8x512xf32>, vector<8x512xf32>, vector<8x512xf32>, vector<8x512xf32>, vector<8x512xf32>, vector<8x512xf32>, vector<8x512xf32>, vector<8x512xf32> -> vector<72x512xf32>
    %c0_95 = arith.constant 0 : index
    %c0_96 = arith.constant 0 : index
    %205 = vector.load %arg3[%c0_95, %c0_96] : memref<8x72xf32, #tpu.memory_space<vmem>>, vector<8x72xf32>
    %cst_97 = arith.constant dense<0.000000e+00> : vector<8x512xf32>
    %206 = tpu.matmul %205, %204, %cst_97 {dimension_numbers = #tpu.dot_dimension_numbers<[1], [0], [0], [1], [0, 0, 1, 1], [], []>} : vector<8x72xf32>, vector<72x512xf32>, vector<8x512xf32> -> vector<8x512xf32>
    %cst_98 = arith.constant dense<0.000000e+00> : vector<8xf32>
    %207 = vector.multi_reduction <add>, %206, %cst_98 [1] : vector<8x512xf32> to vector<8xf32>
    %208 = vector.shape_cast %207 : vector<8xf32> to vector<8x1xf32>
    %cst_99 = arith.constant 5.120000e+02 : f32
    %209 = vector.broadcast %cst_99 : f32 to vector<8x1xf32>
    %210 = arith.divf %208, %209 : vector<8x1xf32>
    %211 = vector.broadcast %210 : vector<8x1xf32> to vector<8x512xf32>
    %212 = arith.subf %206, %211 : vector<8x512xf32>
    %213 = arith.mulf %212, %212 : vector<8x512xf32>
    %cst_100 = arith.constant dense<0.000000e+00> : vector<8xf32>
    %214 = vector.multi_reduction <add>, %213, %cst_100 [1] : vector<8x512xf32> to vector<8xf32>
    %215 = vector.shape_cast %214 : vector<8xf32> to vector<8x1xf32>
    %cst_101 = arith.constant 5.120000e+02 : f32
    %216 = vector.broadcast %cst_101 : f32 to vector<8x1xf32>
    %217 = arith.divf %215, %216 : vector<8x1xf32>
    %cst_102 = arith.constant 9.99999974E-6 : f32
    %218 = vector.broadcast %cst_102 : f32 to vector<8x1xf32>
    %219 = arith.addf %217, %218 : vector<8x1xf32>
    %220 = math.rsqrt %219 : vector<8x1xf32>
    %221 = vector.broadcast %220 : vector<8x1xf32> to vector<8x512xf32>
    %222 = arith.mulf %212, %221 : vector<8x512xf32>
    %c0_103 = arith.constant 0 : index
    %c0_104 = arith.constant 0 : index
    %223 = vector.load %arg4[%c0_103, %c0_104] : memref<8x1xf32, #tpu.memory_space<vmem>>, vector<8x1xf32>
    %224 = vector.broadcast %223 : vector<8x1xf32> to vector<8x512xf32>
    %225 = arith.mulf %222, %224 : vector<8x512xf32>
    %c0_105 = arith.constant 0 : index
    %c0_106 = arith.constant 0 : index
    %226 = vector.load %arg5[%c0_105, %c0_106] : memref<8x1xf32, #tpu.memory_space<vmem>>, vector<8x1xf32>
    %227 = vector.broadcast %226 : vector<8x1xf32> to vector<8x512xf32>
    %228 = arith.addf %225, %227 : vector<8x512xf32>
    %cst_107 = arith.constant 0.000000e+00 : f32
    %229 = vector.broadcast %cst_107 : f32 to vector<8x512xf32>
    %230 = arith.maximumf %228, %229 : vector<8x512xf32>
    %c0_108 = arith.constant 0 : index
    %c128_109 = arith.constant 128 : index
    %231 = vector.load %arg10[%c0_108, %c128_109] : memref<8x768xf32, #tpu.memory_space<vmem>>, vector<8x512xf32>
    tpu.vector_store %arg10[%c0_108, %c128_109], %230 {strides = array<i32>} : memref<8x768xf32, #tpu.memory_space<vmem>>, vector<8x512xf32>,
    %c0_110 = arith.constant 0 : index
    %c111_111 = arith.constant 111 : index
    %232 = vector.load %arg10[%c0_110, %c111_111] : memref<8x768xf32, #tpu.memory_space<vmem>>, vector<8x512xf32>
    %c-1_i32_112 = arith.constant -1 : i32
    %233 = vector.broadcast %c-1_i32_112 : i32 to vector<8x512xi32>
    %234 = arith.addi %0, %233 : vector<8x512xi32>
    %c0_i32_113 = arith.constant 0 : i32
    %235 = vector.broadcast %c0_i32_113 : i32 to vector<8x512xi32>
    %236 = arith.cmpi sge, %234, %235 : vector<8x512xi32>
    %c-1_i32_114 = arith.constant -1 : i32
    %237 = vector.broadcast %c-1_i32_114 : i32 to vector<8x512xi32>
    %238 = arith.addi %0, %237 : vector<8x512xi32>
    %c16_i32_115 = arith.constant 16 : i32
    %239 = vector.broadcast %c16_i32_115 : i32 to vector<8x512xi32>
    %240 = arith.cmpi slt, %238, %239 : vector<8x512xi32>
    %241 = arith.andi %236, %240 : vector<8x512xi1>
    %c-1_i32_116 = arith.constant -1 : i32
    %242 = vector.broadcast %c-1_i32_116 : i32 to vector<8x512xi32>
    %243 = arith.addi %1, %242 : vector<8x512xi32>
    %c0_i32_117 = arith.constant 0 : i32
    %244 = vector.broadcast %c0_i32_117 : i32 to vector<8x512xi32>
    %245 = arith.cmpi sge, %243, %244 : vector<8x512xi32>
    %246 = arith.andi %241, %245 : vector<8x512xi1>
    %c-1_i32_118 = arith.constant -1 : i32
    %247 = vector.broadcast %c-1_i32_118 : i32 to vector<8x512xi32>
    %248 = arith.addi %1, %247 : vector<8x512xi32>
    %c16_i32_119 = arith.constant 16 : i32
    %249 = vector.broadcast %c16_i32_119 : i32 to vector<8x512xi32>
    %250 = arith.cmpi slt, %248, %249 : vector<8x512xi32>
    %251 = arith.andi %246, %250 : vector<8x512xi1>
    %cst_120 = arith.constant 0.000000e+00 : f32
    %252 = vector.broadcast %cst_120 : f32 to vector<8x512xf32>
    %253 = arith.select %251, %232, %252 : vector<8x512xi1>, vector<8x512xf32>
    %c0_121 = arith.constant 0 : index
    %c112_122 = arith.constant 112 : index
    %254 = vector.load %arg10[%c0_121, %c112_122] : memref<8x768xf32, #tpu.memory_space<vmem>>, vector<8x512xf32>
    %c-1_i32_123 = arith.constant -1 : i32
    %255 = vector.broadcast %c-1_i32_123 : i32 to vector<8x512xi32>
    %256 = arith.addi %0, %255 : vector<8x512xi32>
    %c0_i32_124 = arith.constant 0 : i32
    %257 = vector.broadcast %c0_i32_124 : i32 to vector<8x512xi32>
    %258 = arith.cmpi sge, %256, %257 : vector<8x512xi32>
    %c-1_i32_125 = arith.constant -1 : i32
    %259 = vector.broadcast %c-1_i32_125 : i32 to vector<8x512xi32>
    %260 = arith.addi %0, %259 : vector<8x512xi32>
    %c16_i32_126 = arith.constant 16 : i32
    %261 = vector.broadcast %c16_i32_126 : i32 to vector<8x512xi32>
    %262 = arith.cmpi slt, %260, %261 : vector<8x512xi32>
    %263 = arith.andi %258, %262 : vector<8x512xi1>
    %c0_i32_127 = arith.constant 0 : i32
    %264 = vector.broadcast %c0_i32_127 : i32 to vector<8x512xi32>
    %265 = arith.addi %1, %264 : vector<8x512xi32>
    %c0_i32_128 = arith.constant 0 : i32
    %266 = vector.broadcast %c0_i32_128 : i32 to vector<8x512xi32>
    %267 = arith.cmpi sge, %265, %266 : vector<8x512xi32>
    %268 = arith.andi %263, %267 : vector<8x512xi1>
    %c0_i32_129 = arith.constant 0 : i32
    %269 = vector.broadcast %c0_i32_129 : i32 to vector<8x512xi32>
    %270 = arith.addi %1, %269 : vector<8x512xi32>
    %c16_i32_130 = arith.constant 16 : i32
    %271 = vector.broadcast %c16_i32_130 : i32 to vector<8x512xi32>
    %272 = arith.cmpi slt, %270, %271 : vector<8x512xi32>
    %273 = arith.andi %268, %272 : vector<8x512xi1>
    %cst_131 = arith.constant 0.000000e+00 : f32
    %274 = vector.broadcast %cst_131 : f32 to vector<8x512xf32>
    %275 = arith.select %273, %254, %274 : vector<8x512xi1>, vector<8x512xf32>
    %c0_132 = arith.constant 0 : index
    %c113_133 = arith.constant 113 : index
    %276 = vector.load %arg10[%c0_132, %c113_133] : memref<8x768xf32, #tpu.memory_space<vmem>>, vector<8x512xf32>
    %c-1_i32_134 = arith.constant -1 : i32
    %277 = vector.broadcast %c-1_i32_134 : i32 to vector<8x512xi32>
    %278 = arith.addi %0, %277 : vector<8x512xi32>
    %c0_i32_135 = arith.constant 0 : i32
    %279 = vector.broadcast %c0_i32_135 : i32 to vector<8x512xi32>
    %280 = arith.cmpi sge, %278, %279 : vector<8x512xi32>
    %c-1_i32_136 = arith.constant -1 : i32
    %281 = vector.broadcast %c-1_i32_136 : i32 to vector<8x512xi32>
    %282 = arith.addi %0, %281 : vector<8x512xi32>
    %c16_i32_137 = arith.constant 16 : i32
    %283 = vector.broadcast %c16_i32_137 : i32 to vector<8x512xi32>
    %284 = arith.cmpi slt, %282, %283 : vector<8x512xi32>
    %285 = arith.andi %280, %284 : vector<8x512xi1>
    %c1_i32_138 = arith.constant 1 : i32
    %286 = vector.broadcast %c1_i32_138 : i32 to vector<8x512xi32>
    %287 = arith.addi %1, %286 : vector<8x512xi32>
    %c0_i32_139 = arith.constant 0 : i32
    %288 = vector.broadcast %c0_i32_139 : i32 to vector<8x512xi32>
    %289 = arith.cmpi sge, %287, %288 : vector<8x512xi32>
    %290 = arith.andi %285, %289 : vector<8x512xi1>
    %c1_i32_140 = arith.constant 1 : i32
    %291 = vector.broadcast %c1_i32_140 : i32 to vector<8x512xi32>
    %292 = arith.addi %1, %291 : vector<8x512xi32>
    %c16_i32_141 = arith.constant 16 : i32
    %293 = vector.broadcast %c16_i32_141 : i32 to vector<8x512xi32>
    %294 = arith.cmpi slt, %292, %293 : vector<8x512xi32>
    %295 = arith.andi %290, %294 : vector<8x512xi1>
    %cst_142 = arith.constant 0.000000e+00 : f32
    %296 = vector.broadcast %cst_142 : f32 to vector<8x512xf32>
    %297 = arith.select %295, %276, %296 : vector<8x512xi1>, vector<8x512xf32>
    %c0_143 = arith.constant 0 : index
    %c127_144 = arith.constant 127 : index
    %298 = vector.load %arg10[%c0_143, %c127_144] : memref<8x768xf32, #tpu.memory_space<vmem>>, vector<8x512xf32>
    %c0_i32_145 = arith.constant 0 : i32
    %299 = vector.broadcast %c0_i32_145 : i32 to vector<8x512xi32>
    %300 = arith.addi %0, %299 : vector<8x512xi32>
    %c0_i32_146 = arith.constant 0 : i32
    %301 = vector.broadcast %c0_i32_146 : i32 to vector<8x512xi32>
    %302 = arith.cmpi sge, %300, %301 : vector<8x512xi32>
    %c0_i32_147 = arith.constant 0 : i32
    %303 = vector.broadcast %c0_i32_147 : i32 to vector<8x512xi32>
    %304 = arith.addi %0, %303 : vector<8x512xi32>
    %c16_i32_148 = arith.constant 16 : i32
    %305 = vector.broadcast %c16_i32_148 : i32 to vector<8x512xi32>
    %306 = arith.cmpi slt, %304, %305 : vector<8x512xi32>
    %307 = arith.andi %302, %306 : vector<8x512xi1>
    %c-1_i32_149 = arith.constant -1 : i32
    %308 = vector.broadcast %c-1_i32_149 : i32 to vector<8x512xi32>
    %309 = arith.addi %1, %308 : vector<8x512xi32>
    %c0_i32_150 = arith.constant 0 : i32
    %310 = vector.broadcast %c0_i32_150 : i32 to vector<8x512xi32>
    %311 = arith.cmpi sge, %309, %310 : vector<8x512xi32>
    %312 = arith.andi %307, %311 : vector<8x512xi1>
    %c-1_i32_151 = arith.constant -1 : i32
    %313 = vector.broadcast %c-1_i32_151 : i32 to vector<8x512xi32>
    %314 = arith.addi %1, %313 : vector<8x512xi32>
    %c16_i32_152 = arith.constant 16 : i32
    %315 = vector.broadcast %c16_i32_152 : i32 to vector<8x512xi32>
    %316 = arith.cmpi slt, %314, %315 : vector<8x512xi32>
    %317 = arith.andi %312, %316 : vector<8x512xi1>
    %cst_153 = arith.constant 0.000000e+00 : f32
    %318 = vector.broadcast %cst_153 : f32 to vector<8x512xf32>
    %319 = arith.select %317, %298, %318 : vector<8x512xi1>, vector<8x512xf32>
    %c0_154 = arith.constant 0 : index
    %c128_155 = arith.constant 128 : index
    %320 = vector.load %arg10[%c0_154, %c128_155] : memref<8x768xf32, #tpu.memory_space<vmem>>, vector<8x512xf32>
    %c0_i32_156 = arith.constant 0 : i32
    %321 = vector.broadcast %c0_i32_156 : i32 to vector<8x512xi32>
    %322 = arith.addi %0, %321 : vector<8x512xi32>
    %c0_i32_157 = arith.constant 0 : i32
    %323 = vector.broadcast %c0_i32_157 : i32 to vector<8x512xi32>
    %324 = arith.cmpi sge, %322, %323 : vector<8x512xi32>
    %c0_i32_158 = arith.constant 0 : i32
    %325 = vector.broadcast %c0_i32_158 : i32 to vector<8x512xi32>
    %326 = arith.addi %0, %325 : vector<8x512xi32>
    %c16_i32_159 = arith.constant 16 : i32
    %327 = vector.broadcast %c16_i32_159 : i32 to vector<8x512xi32>
    %328 = arith.cmpi slt, %326, %327 : vector<8x512xi32>
    %329 = arith.andi %324, %328 : vector<8x512xi1>
    %c0_i32_160 = arith.constant 0 : i32
    %330 = vector.broadcast %c0_i32_160 : i32 to vector<8x512xi32>
    %331 = arith.addi %1, %330 : vector<8x512xi32>
    %c0_i32_161 = arith.constant 0 : i32
    %332 = vector.broadcast %c0_i32_161 : i32 to vector<8x512xi32>
    %333 = arith.cmpi sge, %331, %332 : vector<8x512xi32>
    %334 = arith.andi %329, %333 : vector<8x512xi1>
    %c0_i32_162 = arith.constant 0 : i32
    %335 = vector.broadcast %c0_i32_162 : i32 to vector<8x512xi32>
    %336 = arith.addi %1, %335 : vector<8x512xi32>
    %c16_i32_163 = arith.constant 16 : i32
    %337 = vector.broadcast %c16_i32_163 : i32 to vector<8x512xi32>
    %338 = arith.cmpi slt, %336, %337 : vector<8x512xi32>
    %339 = arith.andi %334, %338 : vector<8x512xi1>
    %cst_164 = arith.constant 0.000000e+00 : f32
    %340 = vector.broadcast %cst_164 : f32 to vector<8x512xf32>
    %341 = arith.select %339, %320, %340 : vector<8x512xi1>, vector<8x512xf32>
    %c0_165 = arith.constant 0 : index
    %c129_166 = arith.constant 129 : index
    %342 = vector.load %arg10[%c0_165, %c129_166] : memref<8x768xf32, #tpu.memory_space<vmem>>, vector<8x512xf32>
    %c0_i32_167 = arith.constant 0 : i32
    %343 = vector.broadcast %c0_i32_167 : i32 to vector<8x512xi32>
    %344 = arith.addi %0, %343 : vector<8x512xi32>
    %c0_i32_168 = arith.constant 0 : i32
    %345 = vector.broadcast %c0_i32_168 : i32 to vector<8x512xi32>
    %346 = arith.cmpi sge, %344, %345 : vector<8x512xi32>
    %c0_i32_169 = arith.constant 0 : i32
    %347 = vector.broadcast %c0_i32_169 : i32 to vector<8x512xi32>
    %348 = arith.addi %0, %347 : vector<8x512xi32>
    %c16_i32_170 = arith.constant 16 : i32
    %349 = vector.broadcast %c16_i32_170 : i32 to vector<8x512xi32>
    %350 = arith.cmpi slt, %348, %349 : vector<8x512xi32>
    %351 = arith.andi %346, %350 : vector<8x512xi1>
    %c1_i32_171 = arith.constant 1 : i32
    %352 = vector.broadcast %c1_i32_171 : i32 to vector<8x512xi32>
    %353 = arith.addi %1, %352 : vector<8x512xi32>
    %c0_i32_172 = arith.constant 0 : i32
    %354 = vector.broadcast %c0_i32_172 : i32 to vector<8x512xi32>
    %355 = arith.cmpi sge, %353, %354 : vector<8x512xi32>
    %356 = arith.andi %351, %355 : vector<8x512xi1>
    %c1_i32_173 = arith.constant 1 : i32
    %357 = vector.broadcast %c1_i32_173 : i32 to vector<8x512xi32>
    %358 = arith.addi %1, %357 : vector<8x512xi32>
    %c16_i32_174 = arith.constant 16 : i32
    %359 = vector.broadcast %c16_i32_174 : i32 to vector<8x512xi32>
    %360 = arith.cmpi slt, %358, %359 : vector<8x512xi32>
    %361 = arith.andi %356, %360 : vector<8x512xi1>
    %cst_175 = arith.constant 0.000000e+00 : f32
    %362 = vector.broadcast %cst_175 : f32 to vector<8x512xf32>
    %363 = arith.select %361, %342, %362 : vector<8x512xi1>, vector<8x512xf32>
    %c0_176 = arith.constant 0 : index
    %c143_177 = arith.constant 143 : index
    %364 = vector.load %arg10[%c0_176, %c143_177] : memref<8x768xf32, #tpu.memory_space<vmem>>, vector<8x512xf32>
    %c1_i32_178 = arith.constant 1 : i32
    %365 = vector.broadcast %c1_i32_178 : i32 to vector<8x512xi32>
    %366 = arith.addi %0, %365 : vector<8x512xi32>
    %c0_i32_179 = arith.constant 0 : i32
    %367 = vector.broadcast %c0_i32_179 : i32 to vector<8x512xi32>
    %368 = arith.cmpi sge, %366, %367 : vector<8x512xi32>
    %c1_i32_180 = arith.constant 1 : i32
    %369 = vector.broadcast %c1_i32_180 : i32 to vector<8x512xi32>
    %370 = arith.addi %0, %369 : vector<8x512xi32>
    %c16_i32_181 = arith.constant 16 : i32
    %371 = vector.broadcast %c16_i32_181 : i32 to vector<8x512xi32>
    %372 = arith.cmpi slt, %370, %371 : vector<8x512xi32>
    %373 = arith.andi %368, %372 : vector<8x512xi1>
    %c-1_i32_182 = arith.constant -1 : i32
    %374 = vector.broadcast %c-1_i32_182 : i32 to vector<8x512xi32>
    %375 = arith.addi %1, %374 : vector<8x512xi32>
    %c0_i32_183 = arith.constant 0 : i32
    %376 = vector.broadcast %c0_i32_183 : i32 to vector<8x512xi32>
    %377 = arith.cmpi sge, %375, %376 : vector<8x512xi32>
    %378 = arith.andi %373, %377 : vector<8x512xi1>
    %c-1_i32_184 = arith.constant -1 : i32
    %379 = vector.broadcast %c-1_i32_184 : i32 to vector<8x512xi32>
    %380 = arith.addi %1, %379 : vector<8x512xi32>
    %c16_i32_185 = arith.constant 16 : i32
    %381 = vector.broadcast %c16_i32_185 : i32 to vector<8x512xi32>
    %382 = arith.cmpi slt, %380, %381 : vector<8x512xi32>
    %383 = arith.andi %378, %382 : vector<8x512xi1>
    %cst_186 = arith.constant 0.000000e+00 : f32
    %384 = vector.broadcast %cst_186 : f32 to vector<8x512xf32>
    %385 = arith.select %383, %364, %384 : vector<8x512xi1>, vector<8x512xf32>
    %c0_187 = arith.constant 0 : index
    %c144_188 = arith.constant 144 : index
    %386 = vector.load %arg10[%c0_187, %c144_188] : memref<8x768xf32, #tpu.memory_space<vmem>>, vector<8x512xf32>
    %c1_i32_189 = arith.constant 1 : i32
    %387 = vector.broadcast %c1_i32_189 : i32 to vector<8x512xi32>
    %388 = arith.addi %0, %387 : vector<8x512xi32>
    %c0_i32_190 = arith.constant 0 : i32
    %389 = vector.broadcast %c0_i32_190 : i32 to vector<8x512xi32>
    %390 = arith.cmpi sge, %388, %389 : vector<8x512xi32>
    %c1_i32_191 = arith.constant 1 : i32
    %391 = vector.broadcast %c1_i32_191 : i32 to vector<8x512xi32>
    %392 = arith.addi %0, %391 : vector<8x512xi32>
    %c16_i32_192 = arith.constant 16 : i32
    %393 = vector.broadcast %c16_i32_192 : i32 to vector<8x512xi32>
    %394 = arith.cmpi slt, %392, %393 : vector<8x512xi32>
    %395 = arith.andi %390, %394 : vector<8x512xi1>
    %c0_i32_193 = arith.constant 0 : i32
    %396 = vector.broadcast %c0_i32_193 : i32 to vector<8x512xi32>
    %397 = arith.addi %1, %396 : vector<8x512xi32>
    %c0_i32_194 = arith.constant 0 : i32
    %398 = vector.broadcast %c0_i32_194 : i32 to vector<8x512xi32>
    %399 = arith.cmpi sge, %397, %398 : vector<8x512xi32>
    %400 = arith.andi %395, %399 : vector<8x512xi1>
    %c0_i32_195 = arith.constant 0 : i32
    %401 = vector.broadcast %c0_i32_195 : i32 to vector<8x512xi32>
    %402 = arith.addi %1, %401 : vector<8x512xi32>
    %c16_i32_196 = arith.constant 16 : i32
    %403 = vector.broadcast %c16_i32_196 : i32 to vector<8x512xi32>
    %404 = arith.cmpi slt, %402, %403 : vector<8x512xi32>
    %405 = arith.andi %400, %404 : vector<8x512xi1>
    %cst_197 = arith.constant 0.000000e+00 : f32
    %406 = vector.broadcast %cst_197 : f32 to vector<8x512xf32>
    %407 = arith.select %405, %386, %406 : vector<8x512xi1>, vector<8x512xf32>
    %c0_198 = arith.constant 0 : index
    %c145_199 = arith.constant 145 : index
    %408 = vector.load %arg10[%c0_198, %c145_199] : memref<8x768xf32, #tpu.memory_space<vmem>>, vector<8x512xf32>
    %c1_i32_200 = arith.constant 1 : i32
    %409 = vector.broadcast %c1_i32_200 : i32 to vector<8x512xi32>
    %410 = arith.addi %0, %409 : vector<8x512xi32>
    %c0_i32_201 = arith.constant 0 : i32
    %411 = vector.broadcast %c0_i32_201 : i32 to vector<8x512xi32>
    %412 = arith.cmpi sge, %410, %411 : vector<8x512xi32>
    %c1_i32_202 = arith.constant 1 : i32
    %413 = vector.broadcast %c1_i32_202 : i32 to vector<8x512xi32>
    %414 = arith.addi %0, %413 : vector<8x512xi32>
    %c16_i32_203 = arith.constant 16 : i32
    %415 = vector.broadcast %c16_i32_203 : i32 to vector<8x512xi32>
    %416 = arith.cmpi slt, %414, %415 : vector<8x512xi32>
    %417 = arith.andi %412, %416 : vector<8x512xi1>
    %c1_i32_204 = arith.constant 1 : i32
    %418 = vector.broadcast %c1_i32_204 : i32 to vector<8x512xi32>
    %419 = arith.addi %1, %418 : vector<8x512xi32>
    %c0_i32_205 = arith.constant 0 : i32
    %420 = vector.broadcast %c0_i32_205 : i32 to vector<8x512xi32>
    %421 = arith.cmpi sge, %419, %420 : vector<8x512xi32>
    %422 = arith.andi %417, %421 : vector<8x512xi1>
    %c1_i32_206 = arith.constant 1 : i32
    %423 = vector.broadcast %c1_i32_206 : i32 to vector<8x512xi32>
    %424 = arith.addi %1, %423 : vector<8x512xi32>
    %c16_i32_207 = arith.constant 16 : i32
    %425 = vector.broadcast %c16_i32_207 : i32 to vector<8x512xi32>
    %426 = arith.cmpi slt, %424, %425 : vector<8x512xi32>
    %427 = arith.andi %422, %426 : vector<8x512xi1>
    %cst_208 = arith.constant 0.000000e+00 : f32
    %428 = vector.broadcast %cst_208 : f32 to vector<8x512xf32>
    %429 = arith.select %427, %408, %428 : vector<8x512xi1>, vector<8x512xf32>
    %430 = tpu.concatenate %253, %275, %297, %319, %341, %363, %385, %407, %429 in 0 : vector<8x512xf32>, vector<8x512xf32>, vector<8x512xf32>, vector<8x512xf32>, vector<8x512xf32>, vector<8x512xf32>, vector<8x512xf32>, vector<8x512xf32>, vector<8x512xf32> -> vector<72x512xf32>
    %c0_209 = arith.constant 0 : index
    %c0_210 = arith.constant 0 : index
    %431 = vector.load %arg6[%c0_209, %c0_210] : memref<8x72xf32, #tpu.memory_space<vmem>>, vector<8x72xf32>
    %cst_211 = arith.constant dense<0.000000e+00> : vector<8x512xf32>
    %432 = tpu.matmul %431, %430, %cst_211 {dimension_numbers = #tpu.dot_dimension_numbers<[1], [0], [0], [1], [0, 0, 1, 1], [], []>} : vector<8x72xf32>, vector<72x512xf32>, vector<8x512xf32> -> vector<8x512xf32>
    %cst_212 = arith.constant dense<0.000000e+00> : vector<8xf32>
    %433 = vector.multi_reduction <add>, %432, %cst_212 [1] : vector<8x512xf32> to vector<8xf32>
    %434 = vector.shape_cast %433 : vector<8xf32> to vector<8x1xf32>
    %cst_213 = arith.constant 5.120000e+02 : f32
    %435 = vector.broadcast %cst_213 : f32 to vector<8x1xf32>
    %436 = arith.divf %434, %435 : vector<8x1xf32>
    %437 = vector.broadcast %436 : vector<8x1xf32> to vector<8x512xf32>
    %438 = arith.subf %432, %437 : vector<8x512xf32>
    %439 = arith.mulf %438, %438 : vector<8x512xf32>
    %cst_214 = arith.constant dense<0.000000e+00> : vector<8xf32>
    %440 = vector.multi_reduction <add>, %439, %cst_214 [1] : vector<8x512xf32> to vector<8xf32>
    %441 = vector.shape_cast %440 : vector<8xf32> to vector<8x1xf32>
    %cst_215 = arith.constant 5.120000e+02 : f32
    %442 = vector.broadcast %cst_215 : f32 to vector<8x1xf32>
    %443 = arith.divf %441, %442 : vector<8x1xf32>
    %cst_216 = arith.constant 9.99999974E-6 : f32
    %444 = vector.broadcast %cst_216 : f32 to vector<8x1xf32>
    %445 = arith.addf %443, %444 : vector<8x1xf32>
    %446 = math.rsqrt %445 : vector<8x1xf32>
    %447 = vector.broadcast %446 : vector<8x1xf32> to vector<8x512xf32>
    %448 = arith.mulf %438, %447 : vector<8x512xf32>
    %c0_217 = arith.constant 0 : index
    %c0_218 = arith.constant 0 : index
    %449 = vector.load %arg7[%c0_217, %c0_218] : memref<8x1xf32, #tpu.memory_space<vmem>>, vector<8x1xf32>
    %450 = vector.broadcast %449 : vector<8x1xf32> to vector<8x512xf32>
    %451 = arith.mulf %448, %450 : vector<8x512xf32>
    %c0_219 = arith.constant 0 : index
    %c0_220 = arith.constant 0 : index
    %452 = vector.load %arg8[%c0_219, %c0_220] : memref<8x1xf32, #tpu.memory_space<vmem>>, vector<8x1xf32>
    %453 = vector.broadcast %452 : vector<8x1xf32> to vector<8x512xf32>
    %454 = arith.addf %451, %453 : vector<8x512xf32>
    %455 = arith.addf %454, %4 : vector<8x512xf32>
    %cst_221 = arith.constant 0.000000e+00 : f32
    %456 = vector.broadcast %cst_221 : f32 to vector<8x512xf32>
    %457 = arith.maximumf %455, %456 : vector<8x512xf32>
    %c0_222 = arith.constant 0 : index
    %c0_223 = arith.constant 0 : index
    %458 = vector.load %arg9[%c0_222, %c0_223] : memref<8x512xf32, #tpu.memory_space<vmem>>, vector<8x512xf32>
    tpu.vector_store %arg9[%c0_222, %c0_223], %457 {strides = array<i32>} : memref<8x512xf32, #tpu.memory_space<vmem>>, vector<8x512xf32>,
    return
  }
}

</mosaic_0001>

<llo_original>
// kernel: tpu_custom_call.1
$region0: #{tpu_custom_call.1}
  #allocation0 [shape = 'u32[]', space=smem, size = 0x4, offset = 0x4, fixed_abs, tag = 'smem constant byte address 0x4 - core index']
  #allocation1 [shape = 'u32[144,128]{1,0:T(1,128)}', space=vmem, size = 0x12000, scoped, tag = 'internal scratch']
  #allocation2 [shape = 'f32[8,768]{1,0:T(8,128)}', space=vmem, size = 0x6000, scoped, tag = 'scratch operand']
  %s0 = inlined_call_operand.vmem [shape: f32[8,512], index: 0, kind: input, shape index: {}]
  %s1 = inlined_call_operand.hbm [shape: s32[8,512], index: 1, kind: input, shape index: {}]
  %s2 = inlined_call_operand.hbm [shape: s32[8,512], index: 2, kind: input, shape index: {}]
  %s3 = inlined_call_operand.vmem [shape: f32[8,72], index: 3, kind: input, shape index: {}]
  %s4 = inlined_call_operand.vmem [shape: f32[8,1], index: 4, kind: input, shape index: {}]
  %s5 = inlined_call_operand.vmem [shape: f32[8,1], index: 5, kind: input, shape index: {}]
  %s6 = inlined_call_operand.vmem [shape: f32[8,72], index: 6, kind: input, shape index: {}]
  %s7 = inlined_call_operand.vmem [shape: f32[8,1], index: 7, kind: input, shape index: {}]
  %s8 = inlined_call_operand.vmem [shape: f32[8,1], index: 8, kind: input, shape index: {}]
  %s9 = inlined_call_operand.hbm [shape: f32[8,512], index: 9, kind: output, shape index: {}]
  %s10 = sld [smem:[#allocation0]]
  $region54: #{tpu_custom_call.1} parent=0
    _
  %s12 = ssub.s32 1, %s10
  %s13 = scalar_select 0, %s12, %s10
  $region1: #{tpu_custom_call.1} parent=0
    #allocation3 [shape = 'u8[16384]{0}', space=vmem, size = 0x4000, scoped, tag = 'input window, operand 1, single buffered']
    #allocation4 [shape = 's32[1]{0}', space=sflag, size = 0x4, scoped, tag = 'scoped memory for tpu_custom_call.1']
    #allocation5 [shape = 's32[1]{0}', space=sflag, size = 0x4, scoped, tag = 'scoped memory for tpu_custom_call.1']
    #allocation6 [shape = 'u8[16384]{0}', space=vmem, size = 0x4000, scoped, tag = 'input window, operand 2, single buffered']
    #allocation7 [shape = 's32[1]{0}', space=sflag, size = 0x4, scoped, tag = 'scoped memory for tpu_custom_call.1']
    #allocation8 [shape = 'u8[16384]{0}', space=vmem, size = 0x4000, scoped, tag = 'output window, operand 0, single buffered']
    %14 = vsyncpa [#allocation4], 0
    %15 = vsyncpa [#allocation7], 0
    %16 = vsyncpa [#allocation5], 0
    // Predicated region
    $region2: #{tpu_custom_call.1} parent=1 // pred_check
      _
    $region3: #{tpu_custom_call.1} parent=1 // pred_check_branch
      %18 = sbr.rel (0) target = $region5
    $region4: #{tpu_custom_call.1} parent=1 // pred_region
      _
    $region5: #{tpu_custom_call.1} parent=1 // pred_fallthru
      _
    // Predicated region
    $region6: #{tpu_custom_call.1} parent=1 // pred_check
      _
    $region7: #{tpu_custom_call.1} parent=1 // pred_check_branch
      %20 = sbr.rel (0) target = $region9
    $region8: #{tpu_custom_call.1} parent=1 // pred_region
      %s22 = ssub.s32 512, 512
      %23 = vsyncadd [#allocation4], %s22
      %s25 = sshll.u32 [#allocation3], 4
      %s26 = int_to_ptr.vmem [resolvable:$true] %s25
      %28 = dma.hbm_to_vmem [thread:$0]  %s1, 512, %s26, [#allocation4]
    $region9: #{tpu_custom_call.1} parent=1 // pred_fallthru
      _
    // Predicated region
    $region10: #{tpu_custom_call.1} parent=1 // pred_check
      _
    $region11: #{tpu_custom_call.1} parent=1 // pred_check_branch
      %30 = sbr.rel (0) target = $region13
    $region12: #{tpu_custom_call.1} parent=1 // pred_region
      %s32 = ssub.s32 512, 512
      %33 = vsyncadd [#allocation7], %s32
      %s35 = sshll.u32 [#allocation6], 4
      %s36 = int_to_ptr.vmem [resolvable:$true] %s35
      %38 = dma.hbm_to_vmem [thread:$0]  %s2, 512, %s36, [#allocation7]
    $region13: #{tpu_custom_call.1} parent=1 // pred_fallthru
      _
    // Predicated region
    $region14: #{tpu_custom_call.1} parent=1 // pred_check
      _
    $region15: #{tpu_custom_call.1} parent=1 // pred_check_branch
      %40 = sbr.rel (0) target = $region17
    $region16: #{tpu_custom_call.1} parent=1 // pred_region
      _
    $region17: #{tpu_custom_call.1} parent=1 // pred_fallthru
      _
    // Predicated region
    $region18: #{tpu_custom_call.1} parent=1 // pred_check
      _
    $region19: #{tpu_custom_call.1} parent=1 // pred_check_branch
      %42 = sbr.rel (0) target = $region21
    $region20: #{tpu_custom_call.1} parent=1 // pred_region
      _
    $region21: #{tpu_custom_call.1} parent=1 // pred_fallthru
      _
    // Predicated region
    $region22: #{tpu_custom_call.1} parent=1 // pred_check
      _
    $region23: #{tpu_custom_call.1} parent=1 // pred_check_branch
      %44 = sbr.rel (0) target = $region25
    $region24: #{tpu_custom_call.1} parent=1 // pred_region
      _
    $region25: #{tpu_custom_call.1} parent=1 // pred_fallthru
      _
    // Predicated region
    $region26: #{tpu_custom_call.1} parent=1 // pred_check
      _
    $region27: #{tpu_custom_call.1} parent=1 // pred_check_branch
      %46 = sbr.rel (0) target = $region29
    $region28: #{tpu_custom_call.1} parent=1 // pred_region
      _
    $region29: #{tpu_custom_call.1} parent=1 // pred_fallthru
      _
    // Predicated region
    $region30: #{tpu_custom_call.1} parent=1 // pred_check
      _
    $region31: #{tpu_custom_call.1} parent=1 // pred_check_branch
      %48 = sbr.rel (0) target = $region33
    $region32: #{tpu_custom_call.1} parent=1 // pred_region
      _
    $region33: #{tpu_custom_call.1} parent=1 // pred_fallthru
      _
    // Predicated region
    $region34: #{tpu_custom_call.1} parent=1 // pred_check
      _
    $region35: #{tpu_custom_call.1} parent=1 // pred_check_branch
      %50 = sbr.rel (0) target = $region37
    $region36: #{tpu_custom_call.1} parent=1 // pred_region
      _
    $region37: #{tpu_custom_call.1} parent=1 // pred_fallthru
      _
    // Predicated region
    $region38: #{tpu_custom_call.1} parent=1 // pred_check
      _
    $region39: #{tpu_custom_call.1} parent=1 // pred_check_branch
      %52 = sbr.rel (0) target = $region41
    $region40: #{tpu_custom_call.1} parent=1 // pred_region
      %53 = dma.done [#allocation4], 512
    $region41: #{tpu_custom_call.1} parent=1 // pred_fallthru
      _
    // Predicated region
    $region42: #{tpu_custom_call.1} parent=1 // pred_check
      _
    $region43: #{tpu_custom_call.1} parent=1 // pred_check_branch
      %55 = sbr.rel (0) target = $region45
    $region44: #{tpu_custom_call.1} parent=1 // pred_region
      %56 = dma.done [#allocation7], 512
    $region45: #{tpu_custom_call.1} parent=1 // pred_fallthru
      _
    %v57 = vld [vmem:[#allocation3] sm:$0xff]
    %v58 = vld [vmem:[#allocation3 + $0x8] sm:$0xff]
    %v59 = vld [vmem:[#allocation3 + $0x10] sm:$0xff]
    %v60 = vld [vmem:[#allocation3 + $0x18] sm:$0xff]
    %v61 = vld [vmem:[#allocation6] sm:$0xff]
    %v62 = vld [vmem:[#allocation6 + $0x8] sm:$0xff]
    %v63 = vld [vmem:[#allocation6 + $0x10] sm:$0xff]
    %v64 = vld [vmem:[#allocation6 + $0x18] sm:$0xff]
    %65 = vst [vmem:[#allocation2] sm:$0xff] 0.0
    %66 = vst [vmem:[#allocation2 + $0x8] sm:$0xff] 0.0
    %67 = vst [vmem:[#allocation2 + $0x10] sm:$0xff] 0.0
    %68 = vst [vmem:[#allocation2 + $0x18] sm:$0xff] 0.0
    %69 = vst [vmem:[#allocation2 + $0x20] sm:$0xff] 0.0
    %70 = vst [vmem:[#allocation2 + $0x28] sm:$0xff] 0.0
    %v71 = vld [vmem:[%s0] sm:$0xff]
    %v72 = vld [vmem:[%s0 + $0x8] sm:$0xff]
    %v73 = vld [vmem:[%s0 + $0x10] sm:$0xff]
    %v74 = vld [vmem:[%s0 + $0x18] sm:$0xff]
    %75 = vst [vmem:[#allocation2 + $0x8] sm:$0xff] %v71
    %76 = vst [vmem:[#allocation2 + $0x10] sm:$0xff] %v72
    %77 = vst [vmem:[#allocation2 + $0x18] sm:$0xff] %v73
    %78 = vst [vmem:[#allocation2 + $0x20] sm:$0xff] %v74
    %v79 = vld [vmem:[#allocation2] sm:$0xff]
    %v80 = vld [vmem:[#allocation2 + $0x8] sm:$0xff]
    %v81 = vld [vmem:[#allocation2 + $0x10] sm:$0xff]
    %v82 = vld [vmem:[#allocation2 + $0x18] sm:$0xff]
    %v83 = vld [vmem:[#allocation2 + $0x20] sm:$0xff]
    %v84 = vadd.s32 %v57, 4294967295
    %v85 = vadd.s32 %v58, 4294967295
    %v86 = vadd.s32 %v59, 4294967295
    %v87 = vadd.s32 %v60, 4294967295
    %vm88 = vcmp.ge.s32.totalorder %v84, 0
    %vm89 = vcmp.ge.s32.totalorder %v85, 0
    %vm90 = vcmp.ge.s32.totalorder %v86, 0
    %vm91 = vcmp.ge.s32.totalorder %v87, 0
    %vm92 = vcmp.lt.s32.totalorder %v84, 16
    %vm93 = vcmp.lt.s32.totalorder %v85, 16
    %vm94 = vcmp.lt.s32.totalorder %v86, 16
    %vm95 = vcmp.lt.s32.totalorder %v87, 16
    %vm96 = vmand %vm88, %vm92
    %vm97 = vmand %vm89, %vm93
    %vm98 = vmand %vm90, %vm94
    %vm99 = vmand %vm91, %vm95
    %v100 = vadd.s32 %v61, 4294967295
    %v101 = vadd.s32 %v62, 4294967295
    %v102 = vadd.s32 %v63, 4294967295
    %v103 = vadd.s32 %v64, 4294967295
    %vm104 = vcmp.ge.s32.totalorder %v100, 0
    %vm105 = vcmp.ge.s32.totalorder %v101, 0
    %vm106 = vcmp.ge.s32.totalorder %v102, 0
    %vm107 = vcmp.ge.s32.totalorder %v103, 0
    %vm108 = vmand %vm96, %vm104
    %vm109 = vmand %vm97, %vm105
    %vm110 = vmand %vm98, %vm106
    %vm111 = vmand %vm99, %vm107
    %vm112 = vcmp.lt.s32.totalorder %v100, 16
    %vm113 = vcmp.lt.s32.totalorder %v101, 16
    %vm114 = vcmp.lt.s32.totalorder %v102, 16
    %vm115 = vcmp.lt.s32.totalorder %v103, 16
    %vm116 = vmand %vm108, %vm112
    %vm117 = vmand %vm109, %vm113
    %vm118 = vmand %vm110, %vm114
    %vm119 = vmand %vm111, %vm115
    %125 = vrot.lane.b32.xlu0 %v79, 17
    %v126 = vpop.permute.xlu0 %125
    %127 = vrot.lane.b32.xlu0 %v80, 17
    %v128 = vpop.permute.xlu0 %127
    %129 = vrot.lane.b32.xlu0 %v81, 17
    %v130 = vpop.permute.xlu0 %129
    %131 = vrot.lane.b32.xlu0 %v82, 17
    %v132 = vpop.permute.xlu0 %131
    %133 = vrot.lane.b32.xlu0 %v83, 17
    %v134 = vpop.permute.xlu0 %133
    %vm135 = vcmask 138240
    %v136 = vsel %vm135, %v126, %v128
    %v137 = vsel %vm135, %v128, %v130
    %v138 = vsel %vm135, %v130, %v132
    %v139 = vsel %vm135, %v132, %v134
    %v144 = vsel %vm116, %v136, 0.0
    %v145 = vsel %vm117, %v137, 0.0
    %v146 = vsel %vm118, %v138, 0.0
    %v147 = vsel %vm119, %v139, 0.0
    %vm148 = vcmp.ge.s32.totalorder %v61, 0
    %vm149 = vcmp.ge.s32.totalorder %v62, 0
    %vm150 = vcmp.ge.s32.totalorder %v63, 0
    %vm151 = vcmp.ge.s32.totalorder %v64, 0
    %vm152 = vmand %vm96, %vm148
    %vm153 = vmand %vm97, %vm149
    %vm154 = vmand %vm98, %vm150
    %vm155 = vmand %vm99, %vm151
    %vm156 = vcmp.lt.s32.totalorder %v61, 16
    %vm157 = vcmp.lt.s32.totalorder %v62, 16
    %vm158 = vcmp.lt.s32.totalorder %v63, 16
    %vm159 = vcmp.lt.s32.totalorder %v64, 16
    %vm160 = vmand %vm152, %vm156
    %vm161 = vmand %vm153, %vm157
    %vm162 = vmand %vm154, %vm158
    %vm163 = vmand %vm155, %vm159
    %164 = vrot.lane.b32.xlu0 %v79, 16
    %v165 = vpop.permute.xlu0 %164
    %166 = vrot.lane.b32.xlu0 %v80, 16
    %v167 = vpop.permute.xlu0 %166
    %168 = vrot.lane.b32.xlu0 %v81, 16
    %v169 = vpop.permute.xlu0 %168
    %170 = vrot.lane.b32.xlu0 %v82, 16
    %v171 = vpop.permute.xlu0 %170
    %172 = vrot.lane.b32.xlu0 %v83, 16
    %v173 = vpop.permute.xlu0 %172
    %vm174 = vcmask 130048
    %v175 = vsel %vm174, %v165, %v167
    %v176 = vsel %vm174, %v167, %v169
    %v177 = vsel %vm174, %v169, %v171
    %v178 = vsel %vm174, %v171, %v173
    %v183 = vsel %vm160, %v175, 0.0
    %v184 = vsel %vm161, %v176, 0.0
    %v185 = vsel %vm162, %v177, 0.0
    %v186 = vsel %vm163, %v178, 0.0
    %v187 = vadd.s32 %v61, 1
    %v188 = vadd.s32 %v62, 1
    %v189 = vadd.s32 %v63, 1
    %v190 = vadd.s32 %v64, 1
    %vm191 = vcmp.ge.s32.totalorder %v187, 0
    %vm192 = vcmp.ge.s32.totalorder %v188, 0
    %vm193 = vcmp.ge.s32.totalorder %v189, 0
    %vm194 = vcmp.ge.s32.totalorder %v190, 0
    %vm195 = vmand %vm96, %vm191
    %vm196 = vmand %vm97, %vm192
    %vm197 = vmand %vm98, %vm193
    %vm198 = vmand %vm99, %vm194
    %vm199 = vcmp.lt.s32.totalorder %v187, 16
    %vm200 = vcmp.lt.s32.totalorder %v188, 16
    %vm201 = vcmp.lt.s32.totalorder %v189, 16
    %vm202 = vcmp.lt.s32.totalorder %v190, 16
    %vm203 = vmand %vm195, %vm199
    %vm204 = vmand %vm196, %vm200
    %vm205 = vmand %vm197, %vm201
    %vm206 = vmand %vm198, %vm202
    %207 = vrot.lane.b32.xlu0 %v79, 15
    %v208 = vpop.permute.xlu0 %207
    %209 = vrot.lane.b32.xlu0 %v80, 15
    %v210 = vpop.permute.xlu0 %209
    %211 = vrot.lane.b32.xlu0 %v81, 15
    %v212 = vpop.permute.xlu0 %211
    %213 = vrot.lane.b32.xlu0 %v82, 15
    %v214 = vpop.permute.xlu0 %213
    %215 = vrot.lane.b32.xlu0 %v83, 15
    %v216 = vpop.permute.xlu0 %215
    %vm217 = vcmask 121856
    %v218 = vsel %vm217, %v208, %v210
    %v219 = vsel %vm217, %v210, %v212
    %v220 = vsel %vm217, %v212, %v214
    %v221 = vsel %vm217, %v214, %v216
    %v226 = vsel %vm203, %v218, 0.0
    %v227 = vsel %vm204, %v219, 0.0
    %v228 = vsel %vm205, %v220, 0.0
    %v229 = vsel %vm206, %v221, 0.0
    %vm230 = vcmp.ge.s32.totalorder %v57, 0
    %vm231 = vcmp.ge.s32.totalorder %v58, 0
    %vm232 = vcmp.ge.s32.totalorder %v59, 0
    %vm233 = vcmp.ge.s32.totalorder %v60, 0
    %vm234 = vcmp.lt.s32.totalorder %v57, 16
    %vm235 = vcmp.lt.s32.totalorder %v58, 16
    %vm236 = vcmp.lt.s32.totalorder %v59, 16
    %vm237 = vcmp.lt.s32.totalorder %v60, 16
    %vm238 = vmand %vm230, %vm234
    %vm239 = vmand %vm231, %vm235
    %vm240 = vmand %vm232, %vm236
    %vm241 = vmand %vm233, %vm237
    %vm242 = vmand %vm238, %vm104
    %vm243 = vmand %vm239, %vm105
    %vm244 = vmand %vm240, %vm106
    %vm245 = vmand %vm241, %vm107
    %vm246 = vmand %vm242, %vm112
    %vm247 = vmand %vm243, %vm113
    %vm248 = vmand %vm244, %vm114
    %vm249 = vmand %vm245, %vm115
    %250 = vrot.lane.b32.xlu0 %v79, 1
    %v251 = vpop.permute.xlu0 %250
    %252 = vrot.lane.b32.xlu0 %v80, 1
    %v253 = vpop.permute.xlu0 %252
    %254 = vrot.lane.b32.xlu0 %v81, 1
    %v255 = vpop.permute.xlu0 %254
    %256 = vrot.lane.b32.xlu0 %v82, 1
    %v257 = vpop.permute.xlu0 %256
    %258 = vrot.lane.b32.xlu0 %v83, 1
    %v259 = vpop.permute.xlu0 %258
    %vm260 = vcmask 7168
    %v261 = vsel %vm260, %v251, %v253
    %v262 = vsel %vm260, %v253, %v255
    %v263 = vsel %vm260, %v255, %v257
    %v264 = vsel %vm260, %v257, %v259
    %v269 = vsel %vm246, %v261, 0.0
    %v270 = vsel %vm247, %v262, 0.0
    %v271 = vsel %vm248, %v263, 0.0
    %v272 = vsel %vm249, %v264, 0.0
    %vm273 = vmand %vm238, %vm148
    %vm274 = vmand %vm239, %vm149
    %vm275 = vmand %vm240, %vm150
    %vm276 = vmand %vm241, %vm151
    %vm277 = vmand %vm273, %vm156
    %vm278 = vmand %vm274, %vm157
    %vm279 = vmand %vm275, %vm158
    %vm280 = vmand %vm276, %vm159
    %v281 = vsel %vm277, %v80, 0.0
    %v282 = vsel %vm278, %v81, 0.0
    %v283 = vsel %vm279, %v82, 0.0
    %v284 = vsel %vm280, %v83, 0.0
    %v285 = vld [vmem:[#allocation2 + $0x8] sm:$0xff]
    %v286 = vld [vmem:[#allocation2 + $0x10] sm:$0xff]
    %v287 = vld [vmem:[#allocation2 + $0x18] sm:$0xff]
    %v288 = vld [vmem:[#allocation2 + $0x20] sm:$0xff]
    %v289 = vld [vmem:[#allocation2 + $0x28] sm:$0xff]
    %vm290 = vmand %vm238, %vm191
    %vm291 = vmand %vm239, %vm192
    %vm292 = vmand %vm240, %vm193
    %vm293 = vmand %vm241, %vm194
    %vm294 = vmand %vm290, %vm199
    %vm295 = vmand %vm291, %vm200
    %vm296 = vmand %vm292, %vm201
    %vm297 = vmand %vm293, %vm202
    %303 = vrot.lane.b32.xlu0 %v285, 127
    %v304 = vpop.permute.xlu0 %303
    %305 = vrot.lane.b32.xlu0 %v286, 127
    %v306 = vpop.permute.xlu0 %305
    %307 = vrot.lane.b32.xlu0 %v287, 127
    %v308 = vpop.permute.xlu0 %307
    %309 = vrot.lane.b32.xlu0 %v288, 127
    %v310 = vpop.permute.xlu0 %309
    %311 = vrot.lane.b32.xlu0 %v289, 127
    %v312 = vpop.permute.xlu0 %311
    %vm313 = vcmask 1039360
    %v314 = vsel %vm313, %v304, %v306
    %v315 = vsel %vm313, %v306, %v308
    %v316 = vsel %vm313, %v308, %v310
    %v317 = vsel %vm313, %v310, %v312
    %v322 = vsel %vm294, %v314, 0.0
    %v323 = vsel %vm295, %v315, 0.0
    %v324 = vsel %vm296, %v316, 0.0
    %v325 = vsel %vm297, %v317, 0.0
    %v326 = vadd.s32 %v57, 1
    %v327 = vadd.s32 %v58, 1
    %v328 = vadd.s32 %v59, 1
    %v329 = vadd.s32 %v60, 1
    %vm330 = vcmp.ge.s32.totalorder %v326, 0
    %vm331 = vcmp.ge.s32.totalorder %v327, 0
    %vm332 = vcmp.ge.s32.totalorder %v328, 0
    %vm333 = vcmp.ge.s32.totalorder %v329, 0
    %vm334 = vcmp.lt.s32.totalorder %v326, 16
    %vm335 = vcmp.lt.s32.totalorder %v327, 16
    %vm336 = vcmp.lt.s32.totalorder %v328, 16
    %vm337 = vcmp.lt.s32.totalorder %v329, 16
    %vm338 = vmand %vm330, %vm334
    %vm339 = vmand %vm331, %vm335
    %vm340 = vmand %vm332, %vm336
    %vm341 = vmand %vm333, %vm337
    %vm342 = vmand %vm338, %vm104
    %vm343 = vmand %vm339, %vm105
    %vm344 = vmand %vm340, %vm106
    %vm345 = vmand %vm341, %vm107
    %vm346 = vmand %vm342, %vm112
    %vm347 = vmand %vm343, %vm113
    %vm348 = vmand %vm344, %vm114
    %vm349 = vmand %vm345, %vm115
    %350 = vrot.lane.b32.xlu0 %v285, 113
    %v351 = vpop.permute.xlu0 %350
    %352 = vrot.lane.b32.xlu0 %v286, 113
    %v353 = vpop.permute.xlu0 %352
    %354 = vrot.lane.b32.xlu0 %v287, 113
    %v355 = vpop.permute.xlu0 %354
    %356 = vrot.lane.b32.xlu0 %v288, 113
    %v357 = vpop.permute.xlu0 %356
    %358 = vrot.lane.b32.xlu0 %v289, 113
    %v359 = vpop.permute.xlu0 %358
    %vm360 = vcmask 924672
    %v361 = vsel %vm360, %v351, %v353
    %v362 = vsel %vm360, %v353, %v355
    %v363 = vsel %vm360, %v355, %v357
    %v364 = vsel %vm360, %v357, %v359
    %v369 = vsel %vm346, %v361, 0.0
    %v370 = vsel %vm347, %v362, 0.0
    %v371 = vsel %vm348, %v363, 0.0
    %v372 = vsel %vm349, %v364, 0.0
    %vm373 = vmand %vm338, %vm148
    %vm374 = vmand %vm339, %vm149
    %vm375 = vmand %vm340, %vm150
    %vm376 = vmand %vm341, %vm151
    %vm377 = vmand %vm373, %vm156
    %vm378 = vmand %vm374, %vm157
    %vm379 = vmand %vm375, %vm158
    %vm380 = vmand %vm376, %vm159
    %381 = vrot.lane.b32.xlu0 %v285, 112
    %v382 = vpop.permute.xlu0 %381
    %383 = vrot.lane.b32.xlu0 %v286, 112
    %v384 = vpop.permute.xlu0 %383
    %385 = vrot.lane.b32.xlu0 %v287, 112
    %v386 = vpop.permute.xlu0 %385
    %387 = vrot.lane.b32.xlu0 %v288, 112
    %v388 = vpop.permute.xlu0 %387
    %389 = vrot.lane.b32.xlu0 %v289, 112
    %v390 = vpop.permute.xlu0 %389
    %vm391 = vcmask 916480
    %v392 = vsel %vm391, %v382, %v384
    %v393 = vsel %vm391, %v384, %v386
    %v394 = vsel %vm391, %v386, %v388
    %v395 = vsel %vm391, %v388, %v390
    %v400 = vsel %vm377, %v392, 0.0
    %v401 = vsel %vm378, %v393, 0.0
    %v402 = vsel %vm379, %v394, 0.0
    %v403 = vsel %vm380, %v395, 0.0
    %vm404 = vmand %vm338, %vm191
    %vm405 = vmand %vm339, %vm192
    %vm406 = vmand %vm340, %vm193
    %vm407 = vmand %vm341, %vm194
    %vm408 = vmand %vm404, %vm199
    %vm409 = vmand %vm405, %vm200
    %vm410 = vmand %vm406, %vm201
    %vm411 = vmand %vm407, %vm202
    %412 = vrot.lane.b32.xlu0 %v285, 111
    %v413 = vpop.permute.xlu0 %412
    %414 = vrot.lane.b32.xlu0 %v286, 111
    %v415 = vpop.permute.xlu0 %414
    %416 = vrot.lane.b32.xlu0 %v287, 111
    %v417 = vpop.permute.xlu0 %416
    %418 = vrot.lane.b32.xlu0 %v288, 111
    %v419 = vpop.permute.xlu0 %418
    %420 = vrot.lane.b32.xlu0 %v289, 111
    %v421 = vpop.permute.xlu0 %420
    %vm422 = vcmask 908288
    %v423 = vsel %vm422, %v413, %v415
    %v424 = vsel %vm422, %v415, %v417
    %v425 = vsel %vm422, %v417, %v419
    %v426 = vsel %vm422, %v419, %v421
    %v431 = vsel %vm408, %v423, 0.0
    %v432 = vsel %vm409, %v424, 0.0
    %v433 = vsel %vm410, %v425, 0.0
    %v434 = vsel %vm411, %v426, 0.0
    %v435 = vld [vmem:[%s3] sm:$0xff]
    %vm436 = vcmask 588800
    %v438 = vsel %vm436, %v435, 0
    %440 = vmatprep.subr.mxu0 %v145
    %441 = vmatpush1.msra.mxu0 %v144
    %442 = vmatprep.subr.mxu0 %v184
    %443 = vmatpush1.msra.mxu0 %v183
    %444 = vmatprep.subr.mxu0 %v227
    %445 = vmatpush1.msra.mxu0 %v226
    %446 = vmatprep.subr.mxu0 %v270
    %447 = vmatpush1.msra.mxu0 %v269
    %448 = vmatprep.subr.mxu0 %v282
    %449 = vmatpush1.msra.mxu0 %v281
    %450 = vmatprep.subr.mxu0 %v323
    %451 = vmatpush1.msra.mxu0 %v322
    %452 = vmatprep.subr.mxu0 %v370
    %453 = vmatpush1.msra.mxu0 %v369
    %454 = vmatprep.subr.mxu0 %v401
    %455 = vmatpush1.msra.mxu0 %v400
    %456 = vmatprep.subr.mxu0 %v432
    %457 = vmatpush1.msra.mxu0 %v431
    %458 = vmatprep.subr.mxu0 0.0
    %459 = vmatpush1.msra.mxu0 0.0
    %460 = vmatprep.subr.mxu0 0.0
    %461 = vmatpush1.msra.mxu0 0.0
    %462 = vmatprep.subr.mxu0 0.0
    %463 = vmatpush1.msra.mxu0 0.0
    %464 = vmatprep.subr.mxu0 0.0
    %465 = vmatpush1.msra.mxu0 0.0
    %466 = vmatprep.subr.mxu0 0.0
    %467 = vmatpush1.msra.mxu0 0.0
    %468 = vmatprep.subr.mxu0 0.0
    %469 = vmatpush1.msra.mxu0 0.0
    %470 = vmatprep.subr.mxu0 0.0
    %471 = vmatpush1.msra.mxu0 0.0
    %472 = vmatprep.subr.mxu0 0.0
    %473 = vmatpush1.msra.mxu0 0.0
    %474 = vmatprep.subr.mxu0 0.0
    %475 = vmatpush1.msra.mxu0 0.0
    %476 = vmatprep.subr.mxu0 0.0
    %477 = vmatpush1.msra.mxu0 0.0
    %478 = vmatprep.subr.mxu0 0.0
    %479 = vmatpush1.msra.mxu0 0.0
    %480 = vmatprep.subr.mxu0 0.0
    %481 = vmatpush1.msra.mxu0 0.0
    %482 = vmatprep.subr.mxu0 0.0
    %483 = vmatpush1.msra.mxu0 0.0
    %484 = vmatprep.subr.mxu0 0.0
    %485 = vmatpush1.msra.mxu0 0.0
    %486 = vmatprep.subr.mxu0 0.0
    %487 = vmatpush1.msra.mxu0 0.0
    %488 = vmatprep.subr.mxu0 0.0
    %489 = vmatpush1.msra.mxu0 0.0
    %490 = vmatprep.subr.mxu0 0.0
    %491 = vmatpush1.msra.mxu0 0.0
    %492 = vmatprep.subr.mxu0 0.0
    %493 = vmatpush1.msra.mxu0 0.0
    %494 = vmatprep.subr.mxu0 0.0
    %495 = vmatpush1.msra.mxu0 0.0
    %496 = vmatprep.subr.mxu0 0.0
    %497 = vmatpush1.msra.mxu0 0.0
    %498 = vmatprep.subr.mxu0 0.0
    %499 = vmatpush1.msra.mxu0 0.0
    %500 = vmatprep.subr.mxu0 0.0
    %501 = vmatpush1.msra.mxu0 0.0
    %502 = vmatprep.subr.mxu0 0.0
    %503 = vmatpush1.msra.mxu0 0.0
    %504 = vmatprep.mubr.f32.mxu0 0.0
    %505 = vmatmul.mubr.f32.gmra.mrb[0].mxu0 %v438
    %v506 = vpop.f32.mrb[0].mxu0
    %v507 = vadd.f32 0.0, %v506
    %v508 = vpop.f32.mrb[0].mxu0
    %v509 = vadd.f32 0.0, %v508
    %510 = vdwg.mxu0
    %511 = vmatprep.subr.mxu0 %v147
    %512 = vmatpush1.msra.mxu0 %v146
    %513 = vmatprep.subr.mxu0 %v186
    %514 = vmatpush1.msra.mxu0 %v185
    %515 = vmatprep.subr.mxu0 %v229
    %516 = vmatpush1.msra.mxu0 %v228
    %517 = vmatprep.subr.mxu0 %v272
    %518 = vmatpush1.msra.mxu0 %v271
    %519 = vmatprep.subr.mxu0 %v284
    %520 = vmatpush1.msra.mxu0 %v283
    %521 = vmatprep.subr.mxu0 %v325
    %522 = vmatpush1.msra.mxu0 %v324
    %523 = vmatprep.subr.mxu0 %v372
    %524 = vmatpush1.msra.mxu0 %v371
    %525 = vmatprep.subr.mxu0 %v403
    %526 = vmatpush1.msra.mxu0 %v402
    %527 = vmatprep.subr.mxu0 %v434
    %528 = vmatpush1.msra.mxu0 %v433
    %529 = vmatprep.subr.mxu0 0.0
    %530 = vmatpush1.msra.mxu0 0.0
    %531 = vmatprep.subr.mxu0 0.0
    %532 = vmatpush1.msra.mxu0 0.0
    %533 = vmatprep.subr.mxu0 0.0
    %534 = vmatpush1.msra.mxu0 0.0
    %535 = vmatprep.subr.mxu0 0.0
    %536 = vmatpush1.msra.mxu0 0.0
    %537 = vmatprep.subr.mxu0 0.0
    %538 = vmatpush1.msra.mxu0 0.0
    %539 = vmatprep.subr.mxu0 0.0
    %540 = vmatpush1.msra.mxu0 0.0
    %541 = vmatprep.subr.mxu0 0.0
    %542 = vmatpush1.msra.mxu0 0.0
    %543 = vmatprep.subr.mxu0 0.0
    %544 = vmatpush1.msra.mxu0 0.0
    %545 = vmatprep.subr.mxu0 0.0
    %546 = vmatpush1.msra.mxu0 0.0
    %547 = vmatprep.subr.mxu0 0.0
    %548 = vmatpush1.msra.mxu0 0.0
    %549 = vmatprep.subr.mxu0 0.0
    %550 = vmatpush1.msra.mxu0 0.0
    %551 = vmatprep.subr.mxu0 0.0
    %552 = vmatpush1.msra.mxu0 0.0
    %553 = vmatprep.subr.mxu0 0.0
    %554 = vmatpush1.msra.mxu0 0.0
    %555 = vmatprep.subr.mxu0 0.0
    %556 = vmatpush1.msra.mxu0 0.0
    %557 = vmatprep.subr.mxu0 0.0
    %558 = vmatpush1.msra.mxu0 0.0
    %559 = vmatprep.subr.mxu0 0.0
    %560 = vmatpush1.msra.mxu0 0.0
    %561 = vmatprep.subr.mxu0 0.0
    %562 = vmatpush1.msra.mxu0 0.0
    %563 = vmatprep.subr.mxu0 0.0
    %564 = vmatpush1.msra.mxu0 0.0
    %565 = vmatprep.subr.mxu0 0.0
    %566 = vmatpush1.msra.mxu0 0.0
    %567 = vmatprep.subr.mxu0 0.0
    %568 = vmatpush1.msra.mxu0 0.0
    %569 = vmatprep.subr.mxu0 0.0
    %570 = vmatpush1.msra.mxu0 0.0
    %571 = vmatprep.subr.mxu0 0.0
    %572 = vmatpush1.msra.mxu0 0.0
    %573 = vmatprep.subr.mxu0 0.0
    %574 = vmatpush1.msra.mxu0 0.0
    %575 = vmatprep.mubr.f32.mxu0 0.0
    %576 = vmatmul.mubr.f32.gmra.mrb[0].mxu0 %v438
    %v577 = vpop.f32.mrb[0].mxu0
    %v578 = vadd.f32 0.0, %v577
    %v579 = vpop.f32.mrb[0].mxu0
    %v580 = vadd.f32 0.0, %v579
    %581 = vdwg.mxu0
    %v582 = vadd.f32 %v507, %v509
    %v583 = vadd.f32 %v582, %v578
    %v584 = vadd.f32 %v583, %v580
    %585 = vadd.xlane.f32.xlu0 %v584
    %v586 = vpop.xlane.xlu0 %585
    %v587 = vrcp.pop 512.0
    %v588 = vmul.f32 %v586, %v587
    %v589 = vsub.f32 %v507, %v588
    %v590 = vsub.f32 %v509, %v588
    %v591 = vsub.f32 %v578, %v588
    %v592 = vsub.f32 %v580, %v588
    %v593 = vmul.f32 %v589, %v589
    %v594 = vmul.f32 %v590, %v590
    %v595 = vmul.f32 %v591, %v591
    %v596 = vmul.f32 %v592, %v592
    %v597 = vadd.f32 %v593, %v594
    %v598 = vadd.f32 %v597, %v595
    %v599 = vadd.f32 %v598, %v596
    %600 = vadd.xlane.f32.xlu0 %v599
    %v601 = vpop.xlane.xlu0 %600
    %v602 = vmul.f32 %v601, %v587
    %v603 = vadd.f32 %v602, 1e-05
    %v604 = vrsqrt.pop %v603
    %v605 = vmul.f32 %v589, %v604
    %v606 = vmul.f32 %v590, %v604
    %v607 = vmul.f32 %v591, %v604
    %v608 = vmul.f32 %v592, %v604
    %v609 = vld [vmem:[%s4] sm:$0xff]
    %611 = vset.pattern.permute.xlu0 0
    %612 = vperm.xlu0 %611, %v609
    %v613 = vpop.permute.xlu0 %612
    %v615 = vmul.f32 %v605, %v613
    %v616 = vmul.f32 %v606, %v613
    %v617 = vmul.f32 %v607, %v613
    %v618 = vmul.f32 %v608, %v613
    %v619 = vld [vmem:[%s5] sm:$0xff]
    %621 = vset.pattern.permute.xlu0 0
    %622 = vperm.xlu0 %621, %v619
    %v623 = vpop.permute.xlu0 %622
    %v625 = vadd.f32 %v615, %v623
    %v626 = vadd.f32 %v616, %v623
    %v627 = vadd.f32 %v617, %v623
    %v628 = vadd.f32 %v618, %v623
    %v629 = vmax.f32 %v625, 0.0
    %v630 = vmax.f32 %v626, 0.0
    %v631 = vmax.f32 %v627, 0.0
    %v632 = vmax.f32 %v628, 0.0
    %633 = vst [vmem:[#allocation2 + $0x8] sm:$0xff] %v629
    %634 = vst [vmem:[#allocation2 + $0x10] sm:$0xff] %v630
    %635 = vst [vmem:[#allocation2 + $0x18] sm:$0xff] %v631
    %636 = vst [vmem:[#allocation2 + $0x20] sm:$0xff] %v632
    %v637 = vld [vmem:[#allocation2] sm:$0xff]
    %v638 = vld [vmem:[#allocation2 + $0x8] sm:$0xff]
    %v639 = vld [vmem:[#allocation2 + $0x10] sm:$0xff]
    %v640 = vld [vmem:[#allocation2 + $0x18] sm:$0xff]
    %v641 = vld [vmem:[#allocation2 + $0x20] sm:$0xff]
    %647 = vrot.lane.b32.xlu0 %v637, 17
    %v648 = vpop.permute.xlu0 %647
    %649 = vrot.lane.b32.xlu0 %v638, 17
    %v650 = vpop.permute.xlu0 %649
    %651 = vrot.lane.b32.xlu0 %v639, 17
    %v652 = vpop.permute.xlu0 %651
    %653 = vrot.lane.b32.xlu0 %v640, 17
    %v654 = vpop.permute.xlu0 %653
    %655 = vrot.lane.b32.xlu0 %v641, 17
    %v656 = vpop.permute.xlu0 %655
    %v657 = vsel %vm135, %v648, %v650
    %v658 = vsel %vm135, %v650, %v652
    %v659 = vsel %vm135, %v652, %v654
    %v660 = vsel %vm135, %v654, %v656
    %v665 = vsel %vm116, %v657, 0.0
    %v666 = vsel %vm117, %v658, 0.0
    %v667 = vsel %vm118, %v659, 0.0
    %v668 = vsel %vm119, %v660, 0.0
    %669 = vrot.lane.b32.xlu0 %v637, 16
    %v670 = vpop.permute.xlu0 %669
    %671 = vrot.lane.b32.xlu0 %v638, 16
    %v672 = vpop.permute.xlu0 %671
    %673 = vrot.lane.b32.xlu0 %v639, 16
    %v674 = vpop.permute.xlu0 %673
    %675 = vrot.lane.b32.xlu0 %v640, 16
    %v676 = vpop.permute.xlu0 %675
    %677 = vrot.lane.b32.xlu0 %v641, 16
    %v678 = vpop.permute.xlu0 %677
    %v679 = vsel %vm174, %v670, %v672
    %v680 = vsel %vm174, %v672, %v674
    %v681 = vsel %vm174, %v674, %v676
    %v682 = vsel %vm174, %v676, %v678
    %v687 = vsel %vm160, %v679, 0.0
    %v688 = vsel %vm161, %v680, 0.0
    %v689 = vsel %vm162, %v681, 0.0
    %v690 = vsel %vm163, %v682, 0.0
    %691 = vrot.lane.b32.xlu0 %v637, 15
    %v692 = vpop.permute.xlu0 %691
    %693 = vrot.lane.b32.xlu0 %v638, 15
    %v694 = vpop.permute.xlu0 %693
    %695 = vrot.lane.b32.xlu0 %v639, 15
    %v696 = vpop.permute.xlu0 %695
    %697 = vrot.lane.b32.xlu0 %v640, 15
    %v698 = vpop.permute.xlu0 %697
    %699 = vrot.lane.b32.xlu0 %v641, 15
    %v700 = vpop.permute.xlu0 %699
    %v701 = vsel %vm217, %v692, %v694
    %v702 = vsel %vm217, %v694, %v696
    %v703 = vsel %vm217, %v696, %v698
    %v704 = vsel %vm217, %v698, %v700
    %v709 = vsel %vm203, %v701, 0.0
    %v710 = vsel %vm204, %v702, 0.0
    %v711 = vsel %vm205, %v703, 0.0
    %v712 = vsel %vm206, %v704, 0.0
    %713 = vrot.lane.b32.xlu0 %v637, 1
    %v714 = vpop.permute.xlu0 %713
    %715 = vrot.lane.b32.xlu0 %v638, 1
    %v716 = vpop.permute.xlu0 %715
    %717 = vrot.lane.b32.xlu0 %v639, 1
    %v718 = vpop.permute.xlu0 %717
    %719 = vrot.lane.b32.xlu0 %v640, 1
    %v720 = vpop.permute.xlu0 %719
    %721 = vrot.lane.b32.xlu0 %v641, 1
    %v722 = vpop.permute.xlu0 %721
    %v723 = vsel %vm260, %v714, %v716
    %v724 = vsel %vm260, %v716, %v718
    %v725 = vsel %vm260, %v718, %v720
    %v726 = vsel %vm260, %v720, %v722
    %v731 = vsel %vm246, %v723, 0.0
    %v732 = vsel %vm247, %v724, 0.0
    %v733 = vsel %vm248, %v725, 0.0
    %v734 = vsel %vm249, %v726, 0.0
    %v735 = vsel %vm277, %v638, 0.0
    %v736 = vsel %vm278, %v639, 0.0
    %v737 = vsel %vm279, %v640, 0.0
    %v738 = vsel %vm280, %v641, 0.0
    %v739 = vld [vmem:[#allocation2 + $0x8] sm:$0xff]
    %v740 = vld [vmem:[#allocation2 + $0x10] sm:$0xff]
    %v741 = vld [vmem:[#allocation2 + $0x18] sm:$0xff]
    %v742 = vld [vmem:[#allocation2 + $0x20] sm:$0xff]
    %v743 = vld [vmem:[#allocation2 + $0x28] sm:$0xff]
    %749 = vrot.lane.b32.xlu0 %v739, 127
    %v750 = vpop.permute.xlu0 %749
    %751 = vrot.lane.b32.xlu0 %v740, 127
    %v752 = vpop.permute.xlu0 %751
    %753 = vrot.lane.b32.xlu0 %v741, 127
    %v754 = vpop.permute.xlu0 %753
    %755 = vrot.lane.b32.xlu0 %v742, 127
    %v756 = vpop.permute.xlu0 %755
    %757 = vrot.lane.b32.xlu0 %v743, 127
    %v758 = vpop.permute.xlu0 %757
    %v759 = vsel %vm313, %v750, %v752
    %v760 = vsel %vm313, %v752, %v754
    %v761 = vsel %vm313, %v754, %v756
    %v762 = vsel %vm313, %v756, %v758
    %v767 = vsel %vm294, %v759, 0.0
    %v768 = vsel %vm295, %v760, 0.0
    %v769 = vsel %vm296, %v761, 0.0
    %v770 = vsel %vm297, %v762, 0.0
    %771 = vrot.lane.b32.xlu0 %v739, 113
    %v772 = vpop.permute.xlu0 %771
    %773 = vrot.lane.b32.xlu0 %v740, 113
    %v774 = vpop.permute.xlu0 %773
    %775 = vrot.lane.b32.xlu0 %v741, 113
    %v776 = vpop.permute.xlu0 %775
    %777 = vrot.lane.b32.xlu0 %v742, 113
    %v778 = vpop.permute.xlu0 %777
    %779 = vrot.lane.b32.xlu0 %v743, 113
    %v780 = vpop.permute.xlu0 %779
    %v781 = vsel %vm360, %v772, %v774
    %v782 = vsel %vm360, %v774, %v776
    %v783 = vsel %vm360, %v776, %v778
    %v784 = vsel %vm360, %v778, %v780
    %v789 = vsel %vm346, %v781, 0.0
    %v790 = vsel %vm347, %v782, 0.0
    %v791 = vsel %vm348, %v783, 0.0
    %v792 = vsel %vm349, %v784, 0.0
    %793 = vrot.lane.b32.xlu0 %v739, 112
    %v794 = vpop.permute.xlu0 %793
    %795 = vrot.lane.b32.xlu0 %v740, 112
    %v796 = vpop.permute.xlu0 %795
    %797 = vrot.lane.b32.xlu0 %v741, 112
    %v798 = vpop.permute.xlu0 %797
    %799 = vrot.lane.b32.xlu0 %v742, 112
    %v800 = vpop.permute.xlu0 %799
    %801 = vrot.lane.b32.xlu0 %v743, 112
    %v802 = vpop.permute.xlu0 %801
    %v803 = vsel %vm391, %v794, %v796
    %v804 = vsel %vm391, %v796, %v798
    %v805 = vsel %vm391, %v798, %v800
    %v806 = vsel %vm391, %v800, %v802
    %v811 = vsel %vm377, %v803, 0.0
    %v812 = vsel %vm378, %v804, 0.0
    %v813 = vsel %vm379, %v805, 0.0
    %v814 = vsel %vm380, %v806, 0.0
    %815 = vrot.lane.b32.xlu0 %v739, 111
    %v816 = vpop.permute.xlu0 %815
    %817 = vrot.lane.b32.xlu0 %v740, 111
    %v818 = vpop.permute.xlu0 %817
    %819 = vrot.lane.b32.xlu0 %v741, 111
    %v820 = vpop.permute.xlu0 %819
    %821 = vrot.lane.b32.xlu0 %v742, 111
    %v822 = vpop.permute.xlu0 %821
    %823 = vrot.lane.b32.xlu0 %v743, 111
    %v824 = vpop.permute.xlu0 %823
    %v825 = vsel %vm422, %v816, %v818
    %v826 = vsel %vm422, %v818, %v820
    %v827 = vsel %vm422, %v820, %v822
    %v828 = vsel %vm422, %v822, %v824
    %v833 = vsel %vm408, %v825, 0.0
    %v834 = vsel %vm409, %v826, 0.0
    %v835 = vsel %vm410, %v827, 0.0
    %v836 = vsel %vm411, %v828, 0.0
    %v837 = vld [vmem:[%s6] sm:$0xff]
    %v839 = vsel %vm436, %v837, 0
    %841 = vmatprep.subr.mxu0 %v666
    %842 = vmatpush1.msra.mxu0 %v665
    %843 = vmatprep.subr.mxu0 %v688
    %844 = vmatpush1.msra.mxu0 %v687
    %845 = vmatprep.subr.mxu0 %v710
    %846 = vmatpush1.msra.mxu0 %v709
    %847 = vmatprep.subr.mxu0 %v732
    %848 = vmatpush1.msra.mxu0 %v731
    %849 = vmatprep.subr.mxu0 %v736
    %850 = vmatpush1.msra.mxu0 %v735
    %851 = vmatprep.subr.mxu0 %v768
    %852 = vmatpush1.msra.mxu0 %v767
    %853 = vmatprep.subr.mxu0 %v790
    %854 = vmatpush1.msra.mxu0 %v789
    %855 = vmatprep.subr.mxu0 %v812
    %856 = vmatpush1.msra.mxu0 %v811
    %857 = vmatprep.subr.mxu0 %v834
    %858 = vmatpush1.msra.mxu0 %v833
    %859 = vmatprep.subr.mxu0 0.0
    %860 = vmatpush1.msra.mxu0 0.0
    %861 = vmatprep.subr.mxu0 0.0
    %862 = vmatpush1.msra.mxu0 0.0
    %863 = vmatprep.subr.mxu0 0.0
    %864 = vmatpush1.msra.mxu0 0.0
    %865 = vmatprep.subr.mxu0 0.0
    %866 = vmatpush1.msra.mxu0 0.0
    %867 = vmatprep.subr.mxu0 0.0
    %868 = vmatpush1.msra.mxu0 0.0
    %869 = vmatprep.subr.mxu0 0.0
    %870 = vmatpush1.msra.mxu0 0.0
    %871 = vmatprep.subr.mxu0 0.0
    %872 = vmatpush1.msra.mxu0 0.0
    %873 = vmatprep.subr.mxu0 0.0
    %874 = vmatpush1.msra.mxu0 0.0
    %875 = vmatprep.subr.mxu0 0.0
    %876 = vmatpush1.msra.mxu0 0.0
    %877 = vmatprep.subr.mxu0 0.0
    %878 = vmatpush1.msra.mxu0 0.0
    %879 = vmatprep.subr.mxu0 0.0
    %880 = vmatpush1.msra.mxu0 0.0
    %881 = vmatprep.subr.mxu0 0.0
    %882 = vmatpush1.msra.mxu0 0.0
    %883 = vmatprep.subr.mxu0 0.0
    %884 = vmatpush1.msra.mxu0 0.0
    %885 = vmatprep.subr.mxu0 0.0
    %886 = vmatpush1.msra.mxu0 0.0
    %887 = vmatprep.subr.mxu0 0.0
    %888 = vmatpush1.msra.mxu0 0.0
    %889 = vmatprep.subr.mxu0 0.0
    %890 = vmatpush1.msra.mxu0 0.0
    %891 = vmatprep.subr.mxu0 0.0
    %892 = vmatpush1.msra.mxu0 0.0
    %893 = vmatprep.subr.mxu0 0.0
    %894 = vmatpush1.msra.mxu0 0.0
    %895 = vmatprep.subr.mxu0 0.0
    %896 = vmatpush1.msra.mxu0 0.0
    %897 = vmatprep.subr.mxu0 0.0
    %898 = vmatpush1.msra.mxu0 0.0
    %899 = vmatprep.subr.mxu0 0.0
    %900 = vmatpush1.msra.mxu0 0.0
    %901 = vmatprep.subr.mxu0 0.0
    %902 = vmatpush1.msra.mxu0 0.0
    %903 = vmatprep.subr.mxu0 0.0
    %904 = vmatpush1.msra.mxu0 0.0
    %905 = vmatprep.mubr.f32.mxu0 0.0
    %906 = vmatmul.mubr.f32.gmra.mrb[0].mxu0 %v839
    %v907 = vpop.f32.mrb[0].mxu0
    %v908 = vadd.f32 0.0, %v907
    %v909 = vpop.f32.mrb[0].mxu0
    %v910 = vadd.f32 0.0, %v909
    %911 = vdwg.mxu0
    %912 = vmatprep.subr.mxu0 %v668
    %913 = vmatpush1.msra.mxu0 %v667
    %914 = vmatprep.subr.mxu0 %v690
    %915 = vmatpush1.msra.mxu0 %v689
    %916 = vmatprep.subr.mxu0 %v712
    %917 = vmatpush1.msra.mxu0 %v711
    %918 = vmatprep.subr.mxu0 %v734
    %919 = vmatpush1.msra.mxu0 %v733
    %920 = vmatprep.subr.mxu0 %v738
    %921 = vmatpush1.msra.mxu0 %v737
    %922 = vmatprep.subr.mxu0 %v770
    %923 = vmatpush1.msra.mxu0 %v769
    %924 = vmatprep.subr.mxu0 %v792
    %925 = vmatpush1.msra.mxu0 %v791
    %926 = vmatprep.subr.mxu0 %v814
    %927 = vmatpush1.msra.mxu0 %v813
    %928 = vmatprep.subr.mxu0 %v836
    %929 = vmatpush1.msra.mxu0 %v835
    %930 = vmatprep.subr.mxu0 0.0
    %931 = vmatpush1.msra.mxu0 0.0
    %932 = vmatprep.subr.mxu0 0.0
    %933 = vmatpush1.msra.mxu0 0.0
    %934 = vmatprep.subr.mxu0 0.0
    %935 = vmatpush1.msra.mxu0 0.0
    %936 = vmatprep.subr.mxu0 0.0
    %937 = vmatpush1.msra.mxu0 0.0
    %938 = vmatprep.subr.mxu0 0.0
    %939 = vmatpush1.msra.mxu0 0.0
    %940 = vmatprep.subr.mxu0 0.0
    %941 = vmatpush1.msra.mxu0 0.0
    %942 = vmatprep.subr.mxu0 0.0
    %943 = vmatpush1.msra.mxu0 0.0
    %944 = vmatprep.subr.mxu0 0.0
    %945 = vmatpush1.msra.mxu0 0.0
    %946 = vmatprep.subr.mxu0 0.0
    %947 = vmatpush1.msra.mxu0 0.0
    %948 = vmatprep.subr.mxu0 0.0
    %949 = vmatpush1.msra.mxu0 0.0
    %950 = vmatprep.subr.mxu0 0.0
    %951 = vmatpush1.msra.mxu0 0.0
    %952 = vmatprep.subr.mxu0 0.0
    %953 = vmatpush1.msra.mxu0 0.0
    %954 = vmatprep.subr.mxu0 0.0
    %955 = vmatpush1.msra.mxu0 0.0
    %956 = vmatprep.subr.mxu0 0.0
    %957 = vmatpush1.msra.mxu0 0.0
    %958 = vmatprep.subr.mxu0 0.0
    %959 = vmatpush1.msra.mxu0 0.0
    %960 = vmatprep.subr.mxu0 0.0
    %961 = vmatpush1.msra.mxu0 0.0
    %962 = vmatprep.subr.mxu0 0.0
    %963 = vmatpush1.msra.mxu0 0.0
    %964 = vmatprep.subr.mxu0 0.0
    %965 = vmatpush1.msra.mxu0 0.0
    %966 = vmatprep.subr.mxu0 0.0
    %967 = vmatpush1.msra.mxu0 0.0
    %968 = vmatprep.subr.mxu0 0.0
    %969 = vmatpush1.msra.mxu0 0.0
    %970 = vmatprep.subr.mxu0 0.0
    %971 = vmatpush1.msra.mxu0 0.0
    %972 = vmatprep.subr.mxu0 0.0
    %973 = vmatpush1.msra.mxu0 0.0
    %974 = vmatprep.subr.mxu0 0.0
    %975 = vmatpush1.msra.mxu0 0.0
    %976 = vmatprep.mubr.f32.mxu0 0.0
    %977 = vmatmul.mubr.f32.gmra.mrb[0].mxu0 %v839
    %v978 = vpop.f32.mrb[0].mxu0
    %v979 = vadd.f32 0.0, %v978
    %v980 = vpop.f32.mrb[0].mxu0
    %v981 = vadd.f32 0.0, %v980
    %982 = vdwg.mxu0
    %v983 = vadd.f32 %v908, %v910
    %v984 = vadd.f32 %v983, %v979
    %v985 = vadd.f32 %v984, %v981
    %986 = vadd.xlane.f32.xlu0 %v985
    %v987 = vpop.xlane.xlu0 %986
    %v988 = vmul.f32 %v987, %v587
    %v989 = vsub.f32 %v908, %v988
    %v990 = vsub.f32 %v910, %v988
    %v991 = vsub.f32 %v979, %v988
    %v992 = vsub.f32 %v981, %v988
    %v993 = vmul.f32 %v989, %v989
    %v994 = vmul.f32 %v990, %v990
    %v995 = vmul.f32 %v991, %v991
    %v996 = vmul.f32 %v992, %v992
    %v997 = vadd.f32 %v993, %v994
    %v998 = vadd.f32 %v997, %v995
    %v999 = vadd.f32 %v998, %v996
    %1000 = vadd.xlane.f32.xlu0 %v999
    %v1001 = vpop.xlane.xlu0 %1000
    %v1002 = vmul.f32 %v1001, %v587
    %v1003 = vadd.f32 %v1002, 1e-05
    %v1004 = vrsqrt.pop %v1003
    %v1005 = vmul.f32 %v989, %v1004
    %v1006 = vmul.f32 %v990, %v1004
    %v1007 = vmul.f32 %v991, %v1004
    %v1008 = vmul.f32 %v992, %v1004
    %v1009 = vld [vmem:[%s7] sm:$0xff]
    %1011 = vset.pattern.permute.xlu0 0
    %1012 = vperm.xlu0 %1011, %v1009
    %v1013 = vpop.permute.xlu0 %1012
    %v1015 = vmul.f32 %v1005, %v1013
    %v1016 = vmul.f32 %v1006, %v1013
    %v1017 = vmul.f32 %v1007, %v1013
    %v1018 = vmul.f32 %v1008, %v1013
    %v1019 = vld [vmem:[%s8] sm:$0xff]
    %1021 = vset.pattern.permute.xlu0 0
    %1022 = vperm.xlu0 %1021, %v1019
    %v1023 = vpop.permute.xlu0 %1022
    %v1025 = vadd.f32 %v1015, %v1023
    %v1026 = vadd.f32 %v1016, %v1023
    %v1027 = vadd.f32 %v1017, %v1023
    %v1028 = vadd.f32 %v1018, %v1023
    %v1029 = vadd.f32 %v1025, %v71
    %v1030 = vadd.f32 %v1026, %v72
    %v1031 = vadd.f32 %v1027, %v73
    %v1032 = vadd.f32 %v1028, %v74
    %v1033 = vmax.f32 %v1029, 0.0
    %v1034 = vmax.f32 %v1030, 0.0
    %v1035 = vmax.f32 %v1031, 0.0
    %v1036 = vmax.f32 %v1032, 0.0
    %1037 = vst [vmem:[#allocation8] sm:$0xff] %v1033
    %1038 = vst [vmem:[#allocation8 + $0x8] sm:$0xff] %v1034
    %1039 = vst [vmem:[#allocation8 + $0x10] sm:$0xff] %v1035
    %1040 = vst [vmem:[#allocation8 + $0x18] sm:$0xff] %v1036
    // Predicated region
    $region46: #{tpu_custom_call.1} parent=1 // pred_check
      _
    $region47: #{tpu_custom_call.1} parent=1 // pred_check_branch
      %1042 = sbr.rel (0) target = $region49
    $region48: #{tpu_custom_call.1} parent=1 // pred_region
      %s1044 = ssub.s32 512, 512
      %1045 = vsyncadd [#allocation5], %s1044
      %s1047 = sshll.u32 [#allocation8], 4
      %s1048 = int_to_ptr.vmem [resolvable:$true] %s1047
      %1050 = dma.vmem_to_hbm [thread:$0]  %s1048, 512, %s9, [#allocation5]
    $region49: #{tpu_custom_call.1} parent=1 // pred_fallthru
      _
    // Predicated region
    $region50: #{tpu_custom_call.1} parent=1 // pred_check
      _
    $region51: #{tpu_custom_call.1} parent=1 // pred_check_branch
      %1052 = sbr.rel (0) target = $region53
    $region52: #{tpu_custom_call.1} parent=1 // pred_region
      %1053 = dma.done [#allocation5], 512
    $region53: #{tpu_custom_call.1} parent=1 // pred_fallthru
      _
    %1054 = vsyncpa [#allocation4], 1
    %1055 = vsyncpa [#allocation7], 1
    %1056 = vsyncpa [#allocation5], 1

</llo_original>
